<compile_context>
chip_gen: v7x
topology: tpu7x:2x2x1
jax: 0.10.0
libtpu: 0.0.40
codegen_flags: <defaults>
</compile_context>

<pallas_src>
import functools

import jax
import jax.numpy as jnp
from jax.experimental import pallas as pl
from jax.experimental.pallas import tpu as pltpu


def _shifted_softplus(x):
    # schnetpack-style "ssp" activation: softplus(x) - log(2)
    return jnp.maximum(x, 0.0) + jnp.log1p(jnp.exp(-jnp.abs(x))) - jnp.log(2.0)


def _poly_cutoff(d, cutoff):
    # PolynomialCutoff(cutoff, p=9):
    #   f(x) = 1 - 55 x^9 + 99 x^10 - 45 x^11,  x = d/cutoff,  f = 0 for x >= 1.
    x = d * (1.0 / cutoff)
    x3 = x * x * x
    x9 = x3 * x3 * x3
    x10 = x9 * x
    x11 = x10 * x
    f = 1.0 - 55.0 * x9 + 99.0 * x10 - 45.0 * x11
    return jnp.where(x < 1.0, f, jnp.zeros_like(f))


def _mp_kernel(natoms, nneigh, nfeat, cutoff,
               a_ref, p_ref, rbf_ref, dnm_ref, idx_ref,
               wbd_ref, brbf_ref, w1_ref, b1_ref, w2_ref, b2_ref,
               a_out_ref, p_out_ref):
    NN, F = nneigh, nfeat
    rows = a_ref.shape[0]                      # Bt * A (block of folded batches)

    # --- phi_a : Dense(F->F, ssp) -> Dense(F->F)   (MXU + EUP, f32) ---
    a_feat = a_ref[...]                                                    # (rows, F)
    h = jnp.dot(a_feat, w1_ref[...], preferred_element_type=jnp.float32) + b1_ref[...]
    h = _shifted_softplus(h)
    a_ms = jnp.dot(h, w2_ref[...], preferred_element_type=jnp.float32) + b2_ref[...]
    a_ms_bf = a_ms.astype(jnp.bfloat16)        # bf16 operand for the gather matmuls

    # --- phi_rbf for all NN neighbours at once: (rows, NN*R) @ blockdiag(W) ---
    rbf_ms = jnp.dot(rbf_ref[...], wbd_ref[...],
                     preferred_element_type=jnp.float32) + brbf_ref[...]   # (rows, NN*F)

    # --- cutoff(D) * NM gate per (atom, neighbour) pair  (VPU, f32) ---
    dnm = dnm_ref[...]                                                     # (rows, 2*NN)
    gate = _poly_cutoff(dnm[:, :NN], cutoff) * dnm[:, NN:]                 # (rows, NN)

    # --- per-neighbour messages ---
    idx = idx_ref[...]                                                     # (rows, NN)
    col_iota = jax.lax.broadcasted_iota(jnp.int32, (rows, rows), 1)        # hoisted
    p_f32 = p_ref[...].astype(jnp.float32)                                 # dense lane load
    msg_sum = jnp.zeros((rows, F), jnp.float32)

    for n in range(NN):                        # NN small & static -> unrolled
        # aj[i, :] = a_ms[N_local[i, n], :]  via bf16 one-hot matmul (MXU, f32 acc)
        onehot = (col_iota == idx[:, n:n + 1]).astype(jnp.bfloat16)        # (rows, rows)
        aj = jnp.dot(onehot, a_ms_bf, preferred_element_type=jnp.float32)  # (rows, F)
        # ai is just a_ms (pure reuse -- no broadcast matmul needed)
        m_n = a_ms * aj * rbf_ms[:, n * F:(n + 1) * F] * gate[:, n:n + 1]  # (rows, F)
        msg_sum = msg_sum + m_n                # neighbour sum: plain VPU accumulate
        p_out_ref[:, n * F:(n + 1) * F] = p_f32[:, n * F:(n + 1) * F] + m_n

    # NOTE: faithful to the reference forward(): the python variable `a` is
    # shadowed by the atom count in `b, a, n, nf = (*N.size(), ...)` before
    # `a = a + torch.sum(msij, 2)`, so the first output is natoms + sum(msij, 2).
    a_out_ref[...] = jnp.float32(natoms) + msg_sum


def _choose_block_batch(B, A, NN, F, R):
    # rough per-batch block bytes (bf16 p/rbf in, f32 p out, f32 a in/out, sides)
    per_batch = A * NN * F * (2 + 4) + A * NN * R * 2 + A * F * 8 + A * NN * 12
    budget = 4 * 1024 * 1024            # stay far below v7x's 64 MiB physical VMEM
    divisors = [d for d in range(1, B + 1) if B % d == 0]
    feasible = [d for d in divisors if d * per_batch <= budget and d * A <= 512]
    if not feasible:
        feasible = [1]
    # prefer >= 2 grid steps so the parallel axis shards across v7x's 2 TCs
    pref = [d for d in feasible if B // d >= 2]
    return max(pref) if pref else max(feasible)


def message_passing(a, p, rbf, D, N, NM, params, cutoff, block_batch=None):
    w_rbf, b_rbf, w1, b1, w2, b2 = params
    B, A, F = a.shape
    NN = N.shape[2]
    R = rbf.shape[3]

    Bt = block_batch if block_batch is not None else _choose_block_batch(B, A, NN, F, R)
    assert B % Bt == 0
    grid = B // Bt
    BtA = Bt * A

    # ---- batch-folded, lane-dense layouts (free XLA reshapes of contiguous data) ----
    a2 = a.reshape(B * A, F).astype(jnp.float32)
    p2 = p.reshape(B * A, NN * F).astype(jnp.bfloat16)       # bf16 halves HBM read bytes
    rbf2 = rbf.reshape(B * A, NN * R).astype(jnp.bfloat16)
    dnm = jnp.concatenate([D.reshape(B * A, NN), NM.reshape(B * A, NN)],
                          axis=1).astype(jnp.float32)        # packed side input
    # neighbour index offset to the row of the same batch element inside the block
    local_off = (jnp.arange(B, dtype=jnp.int32) % Bt) * A
    idx = (N.astype(jnp.int32) + local_off[:, None, None]).reshape(B * A, NN)

    # ---- grid-invariant weight preprocessing (shared across grid steps) ----
    w_bd = jnp.kron(jnp.eye(NN, dtype=jnp.float32),
                    w_rbf.astype(jnp.float32))               # (NN*R, NN*F) block-diag
    b_rbf_t = jnp.tile(b_rbf.reshape(1, F), (1, NN)).astype(jnp.float32)   # (1, NN*F)

    kernel = functools.partial(_mp_kernel, A, NN, F, float(cutoff))

    def batched(cols):
        return pl.BlockSpec((BtA, cols), lambda i: (i, 0))

    def shared(shape):
        return pl.BlockSpec(shape, lambda i, nd=len(shape): (0,) * nd)

    # TODO(synk): if p is kept in f32 end-to-end, alias it with p_out via
    # input_output_aliases={1: 1} to drop one (B, A, NN, F) HBM allocation; with
    # the bf16 input cast the in/out dtypes differ so aliasing is not possible.
    a_out2, p_out2 = pl.pallas_call(
        kernel,
        out_shape=(jax.ShapeDtypeStruct((B * A, F), jnp.float32),
                   jax.ShapeDtypeStruct((B * A, NN * F), jnp.float32)),
        grid_spec=pltpu.PrefetchScalarGridSpec(
            num_scalar_prefetch=0,
            grid=(grid,),
            in_specs=[
                batched(F),                 # a
                batched(NN * F),            # p   (bf16, lane dense)
                batched(NN * R),            # rbf (bf16, lane dense)
                batched(2 * NN),            # D || NM packed
                batched(NN),                # block-local neighbour indices (int32)
                shared((NN * R, NN * F)),   # block-diag phi_rbf.W
                shared((1, NN * F)),        # tiled phi_rbf.b
                shared((F, F)), shared((1, F)),   # phi_a[0]
                shared((F, F)), shared((1, F)),   # phi_a[1]
            ],
            out_specs=[batched(F), batched(NN * F)],
        ),
        compiler_params=pltpu.CompilerParams(
            dimension_semantics=("parallel",),   # shard blocks across v7x's 2 TCs
            vmem_limit_bytes=32 * 1024 * 1024),
    )(a2, p2, rbf2, dnm, idx, w_bd, b_rbf_t,
      w1.astype(jnp.float32), b1.reshape(1, F).astype(jnp.float32),
      w2.astype(jnp.float32), b2.reshape(1, F).astype(jnp.float32))

    return a_out2.reshape(B, A, F), p_out2.reshape(B, A, NN, F)


def _reference(a, p, rbf, D, N, NM, params, cutoff):
    # pure-JAX f32 reference mirroring the PyTorch forward (incl. the `a` shadowing)
    w_rbf, b_rbf, w1, b1, w2, b2 = params
    B, A, F = a.shape
    rbf_ms = rbf @ w_rbf + b_rbf.reshape(1, F)
    rbf_ms = rbf_ms * _poly_cutoff(D, cutoff)[..., None]
    h = _shifted_softplus(a @ w1 + b1.reshape(1, F))
    a_ms = h @ w2 + b2.reshape(1, F)
    ai = a_ms[:, :, None, :]
    aj = jax.vmap(lambda am, n_: am[n_])(a_ms, N)            # gather over atoms
    msij = ai * aj * rbf_ms * NM[..., None]
    a_out = jnp.float32(A) + msij.sum(2)
    return a_out, p + msij


if __name__ == "__main__":
    key = jax.random.PRNGKey(0)
    B, A, NN, F, R = 4, 8, 8, 32, 16      # batch, atoms, neighbours, n_features, resolution
    cutoff = 5.0

    ks = jax.random.split(key, 10)
    a = jax.random.normal(ks[0], (B, A, F), jnp.float32)
    p = jax.random.normal(ks[1], (B, A, NN, F), jnp.float32)
    rbf = jax.random.normal(ks[2], (B, A, NN, R), jnp.float32)
    D = jax.random.uniform(ks[3], (B, A, NN), jnp.float32, 0.5, 1.5 * cutoff)
    N = jax.random.randint(ks[4], (B, A, NN), 0, A, jnp.int32)
    NM = (jax.random.uniform(ks[5], (B, A, NN)) > 0.2).astype(jnp.float32)

    def xavier(k, shape):
        fan_in, fan_out = shape
        lim = (6.0 / (fan_in + fan_out)) ** 0.5
        return jax.random.uniform(k, shape, jnp.float32, -lim, lim)

    params = (xavier(ks[6], (R, F)), jnp.zeros((1, F), jnp.float32),   # phi_rbf
              xavier(ks[7], (F, F)), jnp.zeros((1, F), jnp.float32),   # phi_a[0]
              xavier(ks[8], (F, F)), jnp.zeros((1, F), jnp.float32))   # phi_a[1]

    a_out, p_out = message_passing(a, p, rbf, D, N, NM, params, cutoff)
    jax.block_until_ready((a_out, p_out))

    a_ref, p_ref = _reference(a, p, rbf, D, N, NM, params, cutoff)
    assert a_out.shape == (B, A, F) and p_out.shape == (B, A, NN, F)
    # tolerance covers the deliberate bf16 cast of p / rbf / gather operands
    assert jnp.allclose(a_out, a_ref, rtol=5e-2, atol=5e-2)
    assert jnp.allclose(p_out, p_ref, rtol=5e-2, atol=5e-2)

    print("KERNEL_OK")
</pallas_src>

<mosaic_0001>
module attributes {stable_mosaic.version = 11 : i64} {
  func.func @_mp_kernel(%arg0: i32, %arg1: memref<16x32xf32, #tpu.memory_space<vmem>>, %arg2: memref<16x256xbf16, #tpu.memory_space<vmem>>, %arg3: memref<16x128xbf16, #tpu.memory_space<vmem>>, %arg4: memref<16x16xf32, #tpu.memory_space<vmem>>, %arg5: memref<16x8xi32, #tpu.memory_space<vmem>>, %arg6: memref<128x256xf32, #tpu.memory_space<vmem>>, %arg7: memref<1x256xf32, #tpu.memory_space<vmem>>, %arg8: memref<32x32xf32, #tpu.memory_space<vmem>>, %arg9: memref<1x32xf32, #tpu.memory_space<vmem>>, %arg10: memref<32x32xf32, #tpu.memory_space<vmem>>, %arg11: memref<1x32xf32, #tpu.memory_space<vmem>>, %arg12: memref<16x32xf32, #tpu.memory_space<vmem>>, %arg13: memref<16x256xf32, #tpu.memory_space<vmem>>) attributes {dimension_semantics = [#tpu.dimension_semantics<parallel>], iteration_bounds = array<i64: 2>, scalar_prefetch = 0 : i64, scratch_operands = 0 : i64, tpu.core_type = #tpu.core_type<tc>, window_params = [{transform_indices = @transform_0, window_bounds = array<i64: 16, 32>}, {transform_indices = @transform_1, window_bounds = array<i64: 16, 256>}, {transform_indices = @transform_2, window_bounds = array<i64: 16, 128>}, {transform_indices = @transform_3, window_bounds = array<i64: 16, 16>}, {transform_indices = @transform_4, window_bounds = array<i64: 16, 8>}, {pipeline_mode = #tpu.pipeline_mode<synchronous>, transform_indices = @transform_5, window_bounds = array<i64: 128, 256>}, {pipeline_mode = #tpu.pipeline_mode<synchronous>, transform_indices = @transform_6, window_bounds = array<i64: 1, 256>}, {pipeline_mode = #tpu.pipeline_mode<synchronous>, transform_indices = @transform_7, window_bounds = array<i64: 32, 32>}, {pipeline_mode = #tpu.pipeline_mode<synchronous>, transform_indices = @transform_8, window_bounds = array<i64: 1, 32>}, {pipeline_mode = #tpu.pipeline_mode<synchronous>, transform_indices = @transform_9, window_bounds = array<i64: 32, 32>}, {pipeline_mode = #tpu.pipeline_mode<synchronous>, transform_indices = @transform_10, window_bounds = array<i64: 1, 32>}, {transform_indices = @transform_11, window_bounds = array<i64: 16, 32>}, {transform_indices = @transform_12, window_bounds = array<i64: 16, 256>}]} {
    %c0 = arith.constant 0 : index
    %c0_0 = arith.constant 0 : index
    %0 = vector.load %arg1[%c0, %c0_0] : memref<16x32xf32, #tpu.memory_space<vmem>>, vector<16x32xf32>
    %c0_1 = arith.constant 0 : index
    %c0_2 = arith.constant 0 : index
    %1 = vector.load %arg8[%c0_1, %c0_2] : memref<32x32xf32, #tpu.memory_space<vmem>>, vector<32x32xf32>
    %cst = arith.constant dense<0.000000e+00> : vector<16x32xf32>
    %2 = tpu.matmul %0, %1, %cst {dimension_numbers = #tpu.dot_dimension_numbers<[1], [0], [0], [1], [0, 0, 1, 1], [], []>} : vector<16x32xf32>, vector<32x32xf32>, vector<16x32xf32> -> vector<16x32xf32>
    %c0_3 = arith.constant 0 : index
    %c0_4 = arith.constant 0 : index
    %3 = vector.load %arg9[%c0_3, %c0_4] : memref<1x32xf32, #tpu.memory_space<vmem>>, vector<1x32xf32>
    %4 = vector.broadcast %3 : vector<1x32xf32> to vector<16x32xf32>
    %5 = arith.addf %2, %4 : vector<16x32xf32>
    %cst_5 = arith.constant 0.000000e+00 : f32
    %6 = vector.broadcast %cst_5 : f32 to vector<16x32xf32>
    %7 = arith.maximumf %5, %6 : vector<16x32xf32>
    %8 = math.absf %5 : vector<16x32xf32>
    %cst_6 = arith.constant 0.000000e+00 : f32
    %9 = vector.broadcast %cst_6 : f32 to vector<16x32xf32>
    %10 = arith.subf %9, %8 : vector<16x32xf32>
    %11 = math.exp %10 : vector<16x32xf32>
    %12 = math.log1p %11 : vector<16x32xf32>
    %13 = arith.addf %7, %12 : vector<16x32xf32>
    %cst_7 = arith.constant 2.000000e+00 : f32
    %14 = math.log %cst_7 : f32
    %15 = vector.broadcast %14 : f32 to vector<16x32xf32>
    %16 = arith.subf %13, %15 : vector<16x32xf32>
    %c0_8 = arith.constant 0 : index
    %c0_9 = arith.constant 0 : index
    %17 = vector.load %arg10[%c0_8, %c0_9] : memref<32x32xf32, #tpu.memory_space<vmem>>, vector<32x32xf32>
    %cst_10 = arith.constant dense<0.000000e+00> : vector<16x32xf32>
    %18 = tpu.matmul %16, %17, %cst_10 {dimension_numbers = #tpu.dot_dimension_numbers<[1], [0], [0], [1], [0, 0, 1, 1], [], []>} : vector<16x32xf32>, vector<32x32xf32>, vector<16x32xf32> -> vector<16x32xf32>
    %c0_11 = arith.constant 0 : index
    %c0_12 = arith.constant 0 : index
    %19 = vector.load %arg11[%c0_11, %c0_12] : memref<1x32xf32, #tpu.memory_space<vmem>>, vector<1x32xf32>
    %20 = vector.broadcast %19 : vector<1x32xf32> to vector<16x32xf32>
    %21 = arith.addf %18, %20 : vector<16x32xf32>
    %22 = arith.truncf %21 : vector<16x32xf32> to vector<16x32xbf16>
    %c0_13 = arith.constant 0 : index
    %c0_14 = arith.constant 0 : index
    %23 = vector.load %arg3[%c0_13, %c0_14] : memref<16x128xbf16, #tpu.memory_space<vmem>>, vector<16x128xbf16>
    %c0_15 = arith.constant 0 : index
    %c0_16 = arith.constant 0 : index
    %24 = vector.load %arg6[%c0_15, %c0_16] : memref<128x256xf32, #tpu.memory_space<vmem>>, vector<128x256xf32>
    %cst_17 = arith.constant dense<0.000000e+00> : vector<16x256xf32>
    %25 = tpu.matmul %23, %24, %cst_17 {dimension_numbers = #tpu.dot_dimension_numbers<[1], [0], [0], [1], [0, 0, 1, 1], [], []>} : vector<16x128xbf16>, vector<128x256xf32>, vector<16x256xf32> -> vector<16x256xf32>
    %c0_18 = arith.constant 0 : index
    %c0_19 = arith.constant 0 : index
    %26 = vector.load %arg7[%c0_18, %c0_19] : memref<1x256xf32, #tpu.memory_space<vmem>>, vector<1x256xf32>
    %27 = vector.broadcast %26 : vector<1x256xf32> to vector<16x256xf32>
    %28 = arith.addf %25, %27 : vector<16x256xf32>
    %c0_20 = arith.constant 0 : index
    %c0_21 = arith.constant 0 : index
    %29 = vector.load %arg4[%c0_20, %c0_21] : memref<16x16xf32, #tpu.memory_space<vmem>>, vector<16x16xf32>
    %30 = vector.extract_strided_slice %29 {offsets = [0, 0], sizes = [16, 8], strides = [1, 1]} : vector<16x16xf32> to vector<16x8xf32>
    %cst_22 = arith.constant 2.000000e-01 : f32
    %31 = vector.broadcast %cst_22 : f32 to vector<16x8xf32>
    %32 = arith.mulf %30, %31 : vector<16x8xf32>
    %33 = arith.mulf %32, %32 : vector<16x8xf32>
    %34 = arith.mulf %33, %32 : vector<16x8xf32>
    %35 = arith.mulf %34, %34 : vector<16x8xf32>
    %36 = arith.mulf %35, %34 : vector<16x8xf32>
    %37 = arith.mulf %36, %32 : vector<16x8xf32>
    %38 = arith.mulf %37, %32 : vector<16x8xf32>
    %cst_23 = arith.constant 5.500000e+01 : f32
    %39 = vector.broadcast %cst_23 : f32 to vector<16x8xf32>
    %40 = arith.mulf %39, %36 : vector<16x8xf32>
    %cst_24 = arith.constant 1.000000e+00 : f32
    %41 = vector.broadcast %cst_24 : f32 to vector<16x8xf32>
    %42 = arith.subf %41, %40 : vector<16x8xf32>
    %cst_25 = arith.constant 9.900000e+01 : f32
    %43 = vector.broadcast %cst_25 : f32 to vector<16x8xf32>
    %44 = arith.mulf %43, %37 : vector<16x8xf32>
    %45 = arith.addf %42, %44 : vector<16x8xf32>
    %cst_26 = arith.constant 4.500000e+01 : f32
    %46 = vector.broadcast %cst_26 : f32 to vector<16x8xf32>
    %47 = arith.mulf %46, %38 : vector<16x8xf32>
    %48 = arith.subf %45, %47 : vector<16x8xf32>
    %cst_27 = arith.constant 1.000000e+00 : f32
    %49 = vector.broadcast %cst_27 : f32 to vector<16x8xf32>
    %50 = arith.cmpf olt, %32, %49 : vector<16x8xf32>
    %cst_28 = arith.constant 0.000000e+00 : f32
    %51 = vector.broadcast %cst_28 : f32 to vector<16x8xf32>
    %52 = arith.select %50, %48, %51 : vector<16x8xi1>, vector<16x8xf32>
    %53 = vector.extract_strided_slice %29 {offsets = [0, 8], sizes = [16, 8], strides = [1, 1]} : vector<16x16xf32> to vector<16x8xf32>
    %54 = arith.mulf %52, %53 : vector<16x8xf32>
    %c0_29 = arith.constant 0 : index
    %c0_30 = arith.constant 0 : index
    %55 = vector.load %arg5[%c0_29, %c0_30] : memref<16x8xi32, #tpu.memory_space<vmem>>, vector<16x8xi32>
    %56 = tpu.iota {dimensions = array<i32: 1>} : vector<16x16xi32>
    %c0_31 = arith.constant 0 : index
    %c0_32 = arith.constant 0 : index
    %57 = vector.load %arg2[%c0_31, %c0_32] : memref<16x256xbf16, #tpu.memory_space<vmem>>, vector<16x256xbf16>
    %58 = arith.extf %57 : vector<16x256xbf16> to vector<16x256xf32>
    %cst_33 = arith.constant 0.000000e+00 : f32
    %59 = vector.broadcast %cst_33 : f32 to vector<16x32xf32>
    %60 = vector.extract_strided_slice %55 {offsets = [0, 0], sizes = [16, 1], strides = [1, 1]} : vector<16x8xi32> to vector<16x1xi32>
    %61 = vector.broadcast %60 : vector<16x1xi32> to vector<16x16xi32>
    %62 = arith.cmpi eq, %56, %61 : vector<16x16xi32>
    %63 = arith.extui %62 : vector<16x16xi1> to vector<16x16xi32>
    %64 = arith.sitofp %63 : vector<16x16xi32> to vector<16x16xf32>
    %65 = arith.truncf %64 : vector<16x16xf32> to vector<16x16xbf16>
    %cst_34 = arith.constant dense<0.000000e+00> : vector<16x32xf32>
    %66 = tpu.matmul %65, %22, %cst_34 {dimension_numbers = #tpu.dot_dimension_numbers<[1], [0], [0], [1], [0, 0, 1, 1], [], []>} : vector<16x16xbf16>, vector<16x32xbf16>, vector<16x32xf32> -> vector<16x32xf32>
    %67 = arith.mulf %21, %66 : vector<16x32xf32>
    %68 = vector.extract_strided_slice %28 {offsets = [0, 0], sizes = [16, 32], strides = [1, 1]} : vector<16x256xf32> to vector<16x32xf32>
    %69 = arith.mulf %67, %68 : vector<16x32xf32>
    %70 = vector.extract_strided_slice %54 {offsets = [0, 0], sizes = [16, 1], strides = [1, 1]} : vector<16x8xf32> to vector<16x1xf32>
    %71 = vector.broadcast %70 : vector<16x1xf32> to vector<16x32xf32>
    %72 = arith.mulf %69, %71 : vector<16x32xf32>
    %73 = arith.addf %59, %72 : vector<16x32xf32>
    %74 = vector.extract_strided_slice %58 {offsets = [0, 0], sizes = [16, 32], strides = [1, 1]} : vector<16x256xf32> to vector<16x32xf32>
    %75 = arith.addf %74, %72 : vector<16x32xf32>
    %c0_35 = arith.constant 0 : index
    %c0_36 = arith.constant 0 : index
    %76 = vector.load %arg13[%c0_35, %c0_36] : memref<16x256xf32, #tpu.memory_space<vmem>>, vector<16x32xf32>
    tpu.vector_store %arg13[%c0_35, %c0_36], %75 {strides = array<i32>} : memref<16x256xf32, #tpu.memory_space<vmem>>, vector<16x32xf32>,
    %77 = vector.extract_strided_slice %55 {offsets = [0, 1], sizes = [16, 1], strides = [1, 1]} : vector<16x8xi32> to vector<16x1xi32>
    %78 = vector.broadcast %77 : vector<16x1xi32> to vector<16x16xi32>
    %79 = arith.cmpi eq, %56, %78 : vector<16x16xi32>
    %80 = arith.extui %79 : vector<16x16xi1> to vector<16x16xi32>
    %81 = arith.sitofp %80 : vector<16x16xi32> to vector<16x16xf32>
    %82 = arith.truncf %81 : vector<16x16xf32> to vector<16x16xbf16>
    %cst_37 = arith.constant dense<0.000000e+00> : vector<16x32xf32>
    %83 = tpu.matmul %82, %22, %cst_37 {dimension_numbers = #tpu.dot_dimension_numbers<[1], [0], [0], [1], [0, 0, 1, 1], [], []>} : vector<16x16xbf16>, vector<16x32xbf16>, vector<16x32xf32> -> vector<16x32xf32>
    %84 = arith.mulf %21, %83 : vector<16x32xf32>
    %85 = vector.extract_strided_slice %28 {offsets = [0, 32], sizes = [16, 32], strides = [1, 1]} : vector<16x256xf32> to vector<16x32xf32>
    %86 = arith.mulf %84, %85 : vector<16x32xf32>
    %87 = vector.extract_strided_slice %54 {offsets = [0, 1], sizes = [16, 1], strides = [1, 1]} : vector<16x8xf32> to vector<16x1xf32>
    %88 = vector.broadcast %87 : vector<16x1xf32> to vector<16x32xf32>
    %89 = arith.mulf %86, %88 : vector<16x32xf32>
    %90 = arith.addf %73, %89 : vector<16x32xf32>
    %91 = vector.extract_strided_slice %58 {offsets = [0, 32], sizes = [16, 32], strides = [1, 1]} : vector<16x256xf32> to vector<16x32xf32>
    %92 = arith.addf %91, %89 : vector<16x32xf32>
    %c0_38 = arith.constant 0 : index
    %c32 = arith.constant 32 : index
    %93 = vector.load %arg13[%c0_38, %c32] : memref<16x256xf32, #tpu.memory_space<vmem>>, vector<16x32xf32>
    tpu.vector_store %arg13[%c0_38, %c32], %92 {strides = array<i32>} : memref<16x256xf32, #tpu.memory_space<vmem>>, vector<16x32xf32>,
    %94 = vector.extract_strided_slice %55 {offsets = [0, 2], sizes = [16, 1], strides = [1, 1]} : vector<16x8xi32> to vector<16x1xi32>
    %95 = vector.broadcast %94 : vector<16x1xi32> to vector<16x16xi32>
    %96 = arith.cmpi eq, %56, %95 : vector<16x16xi32>
    %97 = arith.extui %96 : vector<16x16xi1> to vector<16x16xi32>
    %98 = arith.sitofp %97 : vector<16x16xi32> to vector<16x16xf32>
    %99 = arith.truncf %98 : vector<16x16xf32> to vector<16x16xbf16>
    %cst_39 = arith.constant dense<0.000000e+00> : vector<16x32xf32>
    %100 = tpu.matmul %99, %22, %cst_39 {dimension_numbers = #tpu.dot_dimension_numbers<[1], [0], [0], [1], [0, 0, 1, 1], [], []>} : vector<16x16xbf16>, vector<16x32xbf16>, vector<16x32xf32> -> vector<16x32xf32>
    %101 = arith.mulf %21, %100 : vector<16x32xf32>
    %102 = vector.extract_strided_slice %28 {offsets = [0, 64], sizes = [16, 32], strides = [1, 1]} : vector<16x256xf32> to vector<16x32xf32>
    %103 = arith.mulf %101, %102 : vector<16x32xf32>
    %104 = vector.extract_strided_slice %54 {offsets = [0, 2], sizes = [16, 1], strides = [1, 1]} : vector<16x8xf32> to vector<16x1xf32>
    %105 = vector.broadcast %104 : vector<16x1xf32> to vector<16x32xf32>
    %106 = arith.mulf %103, %105 : vector<16x32xf32>
    %107 = arith.addf %90, %106 : vector<16x32xf32>
    %108 = vector.extract_strided_slice %58 {offsets = [0, 64], sizes = [16, 32], strides = [1, 1]} : vector<16x256xf32> to vector<16x32xf32>
    %109 = arith.addf %108, %106 : vector<16x32xf32>
    %c0_40 = arith.constant 0 : index
    %c64 = arith.constant 64 : index
    %110 = vector.load %arg13[%c0_40, %c64] : memref<16x256xf32, #tpu.memory_space<vmem>>, vector<16x32xf32>
    tpu.vector_store %arg13[%c0_40, %c64], %109 {strides = array<i32>} : memref<16x256xf32, #tpu.memory_space<vmem>>, vector<16x32xf32>,
    %111 = vector.extract_strided_slice %55 {offsets = [0, 3], sizes = [16, 1], strides = [1, 1]} : vector<16x8xi32> to vector<16x1xi32>
    %112 = vector.broadcast %111 : vector<16x1xi32> to vector<16x16xi32>
    %113 = arith.cmpi eq, %56, %112 : vector<16x16xi32>
    %114 = arith.extui %113 : vector<16x16xi1> to vector<16x16xi32>
    %115 = arith.sitofp %114 : vector<16x16xi32> to vector<16x16xf32>
    %116 = arith.truncf %115 : vector<16x16xf32> to vector<16x16xbf16>
    %cst_41 = arith.constant dense<0.000000e+00> : vector<16x32xf32>
    %117 = tpu.matmul %116, %22, %cst_41 {dimension_numbers = #tpu.dot_dimension_numbers<[1], [0], [0], [1], [0, 0, 1, 1], [], []>} : vector<16x16xbf16>, vector<16x32xbf16>, vector<16x32xf32> -> vector<16x32xf32>
    %118 = arith.mulf %21, %117 : vector<16x32xf32>
    %119 = vector.extract_strided_slice %28 {offsets = [0, 96], sizes = [16, 32], strides = [1, 1]} : vector<16x256xf32> to vector<16x32xf32>
    %120 = arith.mulf %118, %119 : vector<16x32xf32>
    %121 = vector.extract_strided_slice %54 {offsets = [0, 3], sizes = [16, 1], strides = [1, 1]} : vector<16x8xf32> to vector<16x1xf32>
    %122 = vector.broadcast %121 : vector<16x1xf32> to vector<16x32xf32>
    %123 = arith.mulf %120, %122 : vector<16x32xf32>
    %124 = arith.addf %107, %123 : vector<16x32xf32>
    %125 = vector.extract_strided_slice %58 {offsets = [0, 96], sizes = [16, 32], strides = [1, 1]} : vector<16x256xf32> to vector<16x32xf32>
    %126 = arith.addf %125, %123 : vector<16x32xf32>
    %c0_42 = arith.constant 0 : index
    %c96 = arith.constant 96 : index
    %127 = vector.load %arg13[%c0_42, %c96] : memref<16x256xf32, #tpu.memory_space<vmem>>, vector<16x32xf32>
    tpu.vector_store %arg13[%c0_42, %c96], %126 {strides = array<i32>} : memref<16x256xf32, #tpu.memory_space<vmem>>, vector<16x32xf32>,
    %128 = vector.extract_strided_slice %55 {offsets = [0, 4], sizes = [16, 1], strides = [1, 1]} : vector<16x8xi32> to vector<16x1xi32>
    %129 = vector.broadcast %128 : vector<16x1xi32> to vector<16x16xi32>
    %130 = arith.cmpi eq, %56, %129 : vector<16x16xi32>
    %131 = arith.extui %130 : vector<16x16xi1> to vector<16x16xi32>
    %132 = arith.sitofp %131 : vector<16x16xi32> to vector<16x16xf32>
    %133 = arith.truncf %132 : vector<16x16xf32> to vector<16x16xbf16>
    %cst_43 = arith.constant dense<0.000000e+00> : vector<16x32xf32>
    %134 = tpu.matmul %133, %22, %cst_43 {dimension_numbers = #tpu.dot_dimension_numbers<[1], [0], [0], [1], [0, 0, 1, 1], [], []>} : vector<16x16xbf16>, vector<16x32xbf16>, vector<16x32xf32> -> vector<16x32xf32>
    %135 = arith.mulf %21, %134 : vector<16x32xf32>
    %136 = vector.extract_strided_slice %28 {offsets = [0, 128], sizes = [16, 32], strides = [1, 1]} : vector<16x256xf32> to vector<16x32xf32>
    %137 = arith.mulf %135, %136 : vector<16x32xf32>
    %138 = vector.extract_strided_slice %54 {offsets = [0, 4], sizes = [16, 1], strides = [1, 1]} : vector<16x8xf32> to vector<16x1xf32>
    %139 = vector.broadcast %138 : vector<16x1xf32> to vector<16x32xf32>
    %140 = arith.mulf %137, %139 : vector<16x32xf32>
    %141 = arith.addf %124, %140 : vector<16x32xf32>
    %142 = vector.extract_strided_slice %58 {offsets = [0, 128], sizes = [16, 32], strides = [1, 1]} : vector<16x256xf32> to vector<16x32xf32>
    %143 = arith.addf %142, %140 : vector<16x32xf32>
    %c0_44 = arith.constant 0 : index
    %c128 = arith.constant 128 : index
    %144 = vector.load %arg13[%c0_44, %c128] : memref<16x256xf32, #tpu.memory_space<vmem>>, vector<16x32xf32>
    tpu.vector_store %arg13[%c0_44, %c128], %143 {strides = array<i32>} : memref<16x256xf32, #tpu.memory_space<vmem>>, vector<16x32xf32>,
    %145 = vector.extract_strided_slice %55 {offsets = [0, 5], sizes = [16, 1], strides = [1, 1]} : vector<16x8xi32> to vector<16x1xi32>
    %146 = vector.broadcast %145 : vector<16x1xi32> to vector<16x16xi32>
    %147 = arith.cmpi eq, %56, %146 : vector<16x16xi32>
    %148 = arith.extui %147 : vector<16x16xi1> to vector<16x16xi32>
    %149 = arith.sitofp %148 : vector<16x16xi32> to vector<16x16xf32>
    %150 = arith.truncf %149 : vector<16x16xf32> to vector<16x16xbf16>
    %cst_45 = arith.constant dense<0.000000e+00> : vector<16x32xf32>
    %151 = tpu.matmul %150, %22, %cst_45 {dimension_numbers = #tpu.dot_dimension_numbers<[1], [0], [0], [1], [0, 0, 1, 1], [], []>} : vector<16x16xbf16>, vector<16x32xbf16>, vector<16x32xf32> -> vector<16x32xf32>
    %152 = arith.mulf %21, %151 : vector<16x32xf32>
    %153 = vector.extract_strided_slice %28 {offsets = [0, 160], sizes = [16, 32], strides = [1, 1]} : vector<16x256xf32> to vector<16x32xf32>
    %154 = arith.mulf %152, %153 : vector<16x32xf32>
    %155 = vector.extract_strided_slice %54 {offsets = [0, 5], sizes = [16, 1], strides = [1, 1]} : vector<16x8xf32> to vector<16x1xf32>
    %156 = vector.broadcast %155 : vector<16x1xf32> to vector<16x32xf32>
    %157 = arith.mulf %154, %156 : vector<16x32xf32>
    %158 = arith.addf %141, %157 : vector<16x32xf32>
    %159 = vector.extract_strided_slice %58 {offsets = [0, 160], sizes = [16, 32], strides = [1, 1]} : vector<16x256xf32> to vector<16x32xf32>
    %160 = arith.addf %159, %157 : vector<16x32xf32>
    %c0_46 = arith.constant 0 : index
    %c160 = arith.constant 160 : index
    %161 = vector.load %arg13[%c0_46, %c160] : memref<16x256xf32, #tpu.memory_space<vmem>>, vector<16x32xf32>
    tpu.vector_store %arg13[%c0_46, %c160], %160 {strides = array<i32>} : memref<16x256xf32, #tpu.memory_space<vmem>>, vector<16x32xf32>,
    %162 = vector.extract_strided_slice %55 {offsets = [0, 6], sizes = [16, 1], strides = [1, 1]} : vector<16x8xi32> to vector<16x1xi32>
    %163 = vector.broadcast %162 : vector<16x1xi32> to vector<16x16xi32>
    %164 = arith.cmpi eq, %56, %163 : vector<16x16xi32>
    %165 = arith.extui %164 : vector<16x16xi1> to vector<16x16xi32>
    %166 = arith.sitofp %165 : vector<16x16xi32> to vector<16x16xf32>
    %167 = arith.truncf %166 : vector<16x16xf32> to vector<16x16xbf16>
    %cst_47 = arith.constant dense<0.000000e+00> : vector<16x32xf32>
    %168 = tpu.matmul %167, %22, %cst_47 {dimension_numbers = #tpu.dot_dimension_numbers<[1], [0], [0], [1], [0, 0, 1, 1], [], []>} : vector<16x16xbf16>, vector<16x32xbf16>, vector<16x32xf32> -> vector<16x32xf32>
    %169 = arith.mulf %21, %168 : vector<16x32xf32>
    %170 = vector.extract_strided_slice %28 {offsets = [0, 192], sizes = [16, 32], strides = [1, 1]} : vector<16x256xf32> to vector<16x32xf32>
    %171 = arith.mulf %169, %170 : vector<16x32xf32>
    %172 = vector.extract_strided_slice %54 {offsets = [0, 6], sizes = [16, 1], strides = [1, 1]} : vector<16x8xf32> to vector<16x1xf32>
    %173 = vector.broadcast %172 : vector<16x1xf32> to vector<16x32xf32>
    %174 = arith.mulf %171, %173 : vector<16x32xf32>
    %175 = arith.addf %158, %174 : vector<16x32xf32>
    %176 = vector.extract_strided_slice %58 {offsets = [0, 192], sizes = [16, 32], strides = [1, 1]} : vector<16x256xf32> to vector<16x32xf32>
    %177 = arith.addf %176, %174 : vector<16x32xf32>
    %c0_48 = arith.constant 0 : index
    %c192 = arith.constant 192 : index
    %178 = vector.load %arg13[%c0_48, %c192] : memref<16x256xf32, #tpu.memory_space<vmem>>, vector<16x32xf32>
    tpu.vector_store %arg13[%c0_48, %c192], %177 {strides = array<i32>} : memref<16x256xf32, #tpu.memory_space<vmem>>, vector<16x32xf32>,
    %179 = vector.extract_strided_slice %55 {offsets = [0, 7], sizes = [16, 1], strides = [1, 1]} : vector<16x8xi32> to vector<16x1xi32>
    %180 = vector.broadcast %179 : vector<16x1xi32> to vector<16x16xi32>
    %181 = arith.cmpi eq, %56, %180 : vector<16x16xi32>
    %182 = arith.extui %181 : vector<16x16xi1> to vector<16x16xi32>
    %183 = arith.sitofp %182 : vector<16x16xi32> to vector<16x16xf32>
    %184 = arith.truncf %183 : vector<16x16xf32> to vector<16x16xbf16>
    %cst_49 = arith.constant dense<0.000000e+00> : vector<16x32xf32>
    %185 = tpu.matmul %184, %22, %cst_49 {dimension_numbers = #tpu.dot_dimension_numbers<[1], [0], [0], [1], [0, 0, 1, 1], [], []>} : vector<16x16xbf16>, vector<16x32xbf16>, vector<16x32xf32> -> vector<16x32xf32>
    %186 = arith.mulf %21, %185 : vector<16x32xf32>
    %187 = vector.extract_strided_slice %28 {offsets = [0, 224], sizes = [16, 32], strides = [1, 1]} : vector<16x256xf32> to vector<16x32xf32>
    %188 = arith.mulf %186, %187 : vector<16x32xf32>
    %189 = vector.extract_strided_slice %54 {offsets = [0, 7], sizes = [16, 1], strides = [1, 1]} : vector<16x8xf32> to vector<16x1xf32>
    %190 = vector.broadcast %189 : vector<16x1xf32> to vector<16x32xf32>
    %191 = arith.mulf %188, %190 : vector<16x32xf32>
    %192 = arith.addf %175, %191 : vector<16x32xf32>
    %193 = vector.extract_strided_slice %58 {offsets = [0, 224], sizes = [16, 32], strides = [1, 1]} : vector<16x256xf32> to vector<16x32xf32>
    %194 = arith.addf %193, %191 : vector<16x32xf32>
    %c0_50 = arith.constant 0 : index
    %c224 = arith.constant 224 : index
    %195 = vector.load %arg13[%c0_50, %c224] : memref<16x256xf32, #tpu.memory_space<vmem>>, vector<16x32xf32>
    tpu.vector_store %arg13[%c0_50, %c224], %194 {strides = array<i32>} : memref<16x256xf32, #tpu.memory_space<vmem>>, vector<16x32xf32>,
    %cst_51 = arith.constant 8.000000e+00 : f32
    %196 = vector.broadcast %cst_51 : f32 to vector<16x32xf32>
    %197 = arith.addf %196, %192 : vector<16x32xf32>
    %c0_52 = arith.constant 0 : index
    %c0_53 = arith.constant 0 : index
    %198 = vector.load %arg12[%c0_52, %c0_53] : memref<16x32xf32, #tpu.memory_space<vmem>>, vector<16x32xf32>
    tpu.vector_store %arg12[%c0_52, %c0_53], %197 {strides = array<i32>} : memref<16x32xf32, #tpu.memory_space<vmem>>, vector<16x32xf32>,
    return
  }
  func.func @transform_0(%arg0: i32) -> (i32, i32) {
    %c0_i32 = arith.constant 0 : i32
    %c0_i32_0 = arith.constant 0 : i32
    return %arg0, %c0_i32 : i32, i32
  }
  func.func @transform_1(%arg0: i32) -> (i32, i32) {
    %c0_i32 = arith.constant 0 : i32
    %c0_i32_0 = arith.constant 0 : i32
    return %arg0, %c0_i32 : i32, i32
  }
  func.func @transform_2(%arg0: i32) -> (i32, i32) {
    %c0_i32 = arith.constant 0 : i32
    %c0_i32_0 = arith.constant 0 : i32
    return %arg0, %c0_i32 : i32, i32
  }
  func.func @transform_3(%arg0: i32) -> (i32, i32) {
    %c0_i32 = arith.constant 0 : i32
    %c0_i32_0 = arith.constant 0 : i32
    return %arg0, %c0_i32 : i32, i32
  }
  func.func @transform_4(%arg0: i32) -> (i32, i32) {
    %c0_i32 = arith.constant 0 : i32
    %c0_i32_0 = arith.constant 0 : i32
    return %arg0, %c0_i32 : i32, i32
  }
  func.func @transform_5(%arg0: i32) -> (i32, i32) {
    %c0_i32 = arith.constant 0 : i32
    %c0_i32_0 = arith.constant 0 : i32
    %c0_i32_1 = arith.constant 0 : i32
    return %c0_i32, %c0_i32_0 : i32, i32
  }
  func.func @transform_6(%arg0: i32) -> (i32, i32) {
    %c0_i32 = arith.constant 0 : i32
    %c0_i32_0 = arith.constant 0 : i32
    %c0_i32_1 = arith.constant 0 : i32
    return %c0_i32, %c0_i32_0 : i32, i32
  }
  func.func @transform_7(%arg0: i32) -> (i32, i32) {
    %c0_i32 = arith.constant 0 : i32
    %c0_i32_0 = arith.constant 0 : i32
    %c0_i32_1 = arith.constant 0 : i32
    return %c0_i32, %c0_i32_0 : i32, i32
  }
  func.func @transform_8(%arg0: i32) -> (i32, i32) {
    %c0_i32 = arith.constant 0 : i32
    %c0_i32_0 = arith.constant 0 : i32
    %c0_i32_1 = arith.constant 0 : i32
    return %c0_i32, %c0_i32_0 : i32, i32
  }
  func.func @transform_9(%arg0: i32) -> (i32, i32) {
    %c0_i32 = arith.constant 0 : i32
    %c0_i32_0 = arith.constant 0 : i32
    %c0_i32_1 = arith.constant 0 : i32
    return %c0_i32, %c0_i32_0 : i32, i32
  }
  func.func @transform_10(%arg0: i32) -> (i32, i32) {
    %c0_i32 = arith.constant 0 : i32
    %c0_i32_0 = arith.constant 0 : i32
    %c0_i32_1 = arith.constant 0 : i32
    return %c0_i32, %c0_i32_0 : i32, i32
  }
  func.func @transform_11(%arg0: i32) -> (i32, i32) {
    %c0_i32 = arith.constant 0 : i32
    %c0_i32_0 = arith.constant 0 : i32
    return %arg0, %c0_i32 : i32, i32
  }
  func.func @transform_12(%arg0: i32) -> (i32, i32) {
    %c0_i32 = arith.constant 0 : i32
    %c0_i32_0 = arith.constant 0 : i32
    return %arg0, %c0_i32 : i32, i32
  }
}

</mosaic_0001>

<llo_original>
// kernel: tpu_custom_call.1
$region0: #{tpu_custom_call.1}
  #allocation0 [shape = 'u32[]', space=smem, size = 0x4, offset = 0x4, fixed_abs, tag = 'smem constant byte address 0x4 - core index']
  #allocation1 [shape = 'u32[144,128]{1,0:T(1,128)}', space=vmem, size = 0x12000, scoped, tag = 'internal scratch']
  %s0 = inlined_call_operand.vmem [shape: f32[32,32], index: 0, kind: input, shape index: {}]
  %s1 = inlined_call_operand.vmem [shape: bf16[32,256], index: 1, kind: input, shape index: {}]
  %s2 = inlined_call_operand.hbm [shape: bf16[32,128], index: 2, kind: input, shape index: {}]
  %s3 = inlined_call_operand.vmem [shape: f32[32,16], index: 3, kind: input, shape index: {}]
  %s4 = inlined_call_operand.vmem [shape: s32[32,8], index: 4, kind: input, shape index: {}]
  %s5 = inlined_call_operand.hbm [shape: f32[128,256], index: 5, kind: input, shape index: {}]
  %s6 = inlined_call_operand.vmem [shape: f32[1,256], index: 6, kind: input, shape index: {}]
  %s7 = inlined_call_operand.vmem [shape: f32[32,32], index: 7, kind: input, shape index: {}]
  %s8 = inlined_call_operand.vmem [shape: f32[1,32], index: 8, kind: input, shape index: {}]
  %s9 = inlined_call_operand.hbm [shape: f32[32,32], index: 9, kind: input, shape index: {}]
  %s10 = inlined_call_operand.vmem [shape: f32[1,32], index: 10, kind: input, shape index: {}]
  %s11 = inlined_call_operand.hbm [shape: f32[32,32], index: 11, kind: output, shape index: {0}]
  %s12 = inlined_call_operand.hbm [shape: f32[32,256], index: 12, kind: output, shape index: {1}]
  %13 = xla_tuple %s11, %s12
  %s14 = sld [smem:[#allocation0]]
  $region97: #{tpu_custom_call.1} parent=0
    _
  %s16 = ssub.s32 1, %s14
  %s17 = scalar_select 0, %s16, %s14
  $region1: #{tpu_custom_call.1} parent=0
    #allocation2 [shape = 'u8[8192]{0}', space=vmem, size = 0x2000, scoped, tag = 'input window, operand 2']
    #allocation3 [shape = 's32[2]{0}', space=sflag, size = 0x8, scoped, tag = 'scoped memory for tpu_custom_call.1']
    #allocation4 [shape = 's32[2]{0}', space=sflag, size = 0x8, scoped, tag = 'scoped memory for tpu_custom_call.1']
    #allocation5 [shape = 'u8[131072]{0}', space=vmem, size = 0x20000, scoped, tag = 'input window, operand 5, single buffered']
    #allocation6 [shape = 's32[1]{0}', space=sflag, size = 0x4, scoped, tag = 'scoped memory for tpu_custom_call.1']
    #allocation7 [shape = 'u8[16384]{0}', space=vmem, size = 0x4000, scoped, tag = 'input window, operand 9, single buffered']
    #allocation8 [shape = 'u8[16384]{0}', space=vmem, size = 0x4000, scoped, tag = 'output window, operand 0']
    #allocation9 [shape = 'u8[32768]{0}', space=vmem, size = 0x8000, scoped, tag = 'output window, operand 1']
    #allocation10 [shape = 's32[2]{0}', space=sflag, size = 0x8, scoped, tag = 'scoped memory for tpu_custom_call.1']
    %18 = vsyncpa [#allocation3], 0
    %s19 = scalar_lea.sflag [#allocation3], 1
    %20 = vsyncpa %s19, 0
    %21 = vsyncpa [#allocation6], 0
    %22 = vsyncpa [#allocation4], 0
    %s23 = scalar_lea.sflag [#allocation4], 1
    %24 = vsyncpa %s23, 0
    %25 = vsyncpa [#allocation10], 0
    %s26 = scalar_lea.sflag [#allocation10], 1
    %27 = vsyncpa %s26, 0
    loop: start=0, step=1, limit=4
    $region2: #{tpu_custom_call.1} parent=1 // loop_pre_header
      _
    $region3: #{tpu_custom_call.1} parent=1 // loop_header
      %s29 = sphi 0, %s33
      %p30 = scmp.ge.s32.totalorder %s29, 4
      %s39 = sphi 0, %s41
      %s42 = sphi 0, %s39
      %s43 = sphi 0, %s42
      %s59 = sphi 0, %s43
      %s65 = sphi 0, %s67
      %s68 = sphi 0, %s65
      %s69 = sphi 0, %s68
      %s85 = sphi 0, %s69
      %s91 = sphi 0, %s93
      %s94 = sphi 0, %s91
      %s95 = sphi 0, %s94
      %s111 = sphi 0, %s95
      %s117 = sphi 0, %s119
      %s120 = sphi 0, %s117
      %s121 = sphi 0, %s120
      %s137 = sphi 0, %s121
      %s143 = sphi 0, %s145
      %s146 = sphi 0, %s143
      %s147 = sphi 0, %s146
      %s163 = sphi 0, %s147
      %s167 = sphi 0, %s167
      %s169 = sphi 0, %s167
      %s170 = sphi 0, %s169
      %s184 = sphi 0, %s170
      %s188 = sphi 0, %s188
      %s190 = sphi 0, %s188
      %s191 = sphi 0, %s190
      %s205 = sphi 0, %s191
      %s209 = sphi 0, %s209
      %s211 = sphi 0, %s209
      %s212 = sphi 0, %s211
      %s226 = sphi 0, %s212
      %s230 = sphi 0, %s230
      %s232 = sphi 0, %s230
      %s233 = sphi 0, %s232
      %s247 = sphi 0, %s233
      %s251 = sphi 0, %s251
      %s253 = sphi 0, %s251
      %s254 = sphi 0, %s253
      %s268 = sphi 0, %s254
      %s272 = sphi 0, %s272
      %s274 = sphi 0, %s272
      %s275 = sphi 0, %s274
      %s289 = sphi 0, %s275
      %s295 = sphi 0, %s297
      %s298 = sphi 0, %s295
      %s299 = sphi 0, %s298
      %s315 = sphi 0, %s299
      %s321 = sphi 0, %s323
      %s324 = sphi 0, %s321
      %s325 = sphi 0, %s324
      %s341 = sphi 0, %s325
    $region4: #{tpu_custom_call.1} parent=1 // loop_header_branch
      %32 = sbr.rel (%p30) target = $region8
    $region5: #{tpu_custom_call.1} parent=1 // loop_body
      %s34 = ssub.s32 %s29, 1
      %s35 = ssub.s32 %s29, 2
      %s36 = sadd.s32 %s29, 1
      %s37 = ssub.s32 %s29, %s36
      %p38 = scmp.eq.s32.totalorder %s37, 0
      %s40 = sadd.s32 %s39, 1
      %s41 = scalar_select %p38, %s39, %s40
      %p44 = pneg %p38
      %p45 = scmp.eq.s32.totalorder %s29, 1
      %p46 = por %p44, %p45
      %p47 = scmp.ne.s32.totalorder %s39, %s42
      %p48 = scmp.eq.s32.totalorder %s29, 0
      %p49 = por %p47, %p48
      %p50 = scmp.ne.s32.totalorder %s39, %s42
      %p51 = scmp.eq.s32.totalorder %s34, 1
      %p52 = por %p50, %p51
      %p53 = scmp.ne.s32.totalorder %s42, %s43
      %p54 = scmp.eq.s32.totalorder %s34, 0
      %p55 = por %p53, %p54
      %p56 = scmp.ne.s32.totalorder %s42, %s43
      %p57 = scmp.eq.s32.totalorder %s35, 1
      %p58 = por %p56, %p57
      %p60 = scmp.ne.s32.totalorder %s43, %s59
      %p61 = scmp.eq.s32.totalorder %s35, 0
      %p62 = por %p60, %p61
      %s63 = ssub.s32 %s29, %s36
      %p64 = scmp.eq.s32.totalorder %s63, 0
      %s66 = sadd.s32 %s65, 1
      %s67 = scalar_select %p64, %s65, %s66
      %p70 = pneg %p64
      %p71 = scmp.eq.s32.totalorder %s29, 1
      %p72 = por %p70, %p71
      %p73 = scmp.ne.s32.totalorder %s65, %s68
      %p74 = scmp.eq.s32.totalorder %s29, 0
      %p75 = por %p73, %p74
      %p76 = scmp.ne.s32.totalorder %s65, %s68
      %p77 = scmp.eq.s32.totalorder %s34, 1
      %p78 = por %p76, %p77
      %p79 = scmp.ne.s32.totalorder %s68, %s69
      %p80 = scmp.eq.s32.totalorder %s34, 0
      %p81 = por %p79, %p80
      %p82 = scmp.ne.s32.totalorder %s68, %s69
      %p83 = scmp.eq.s32.totalorder %s35, 1
      %p84 = por %p82, %p83
      %p86 = scmp.ne.s32.totalorder %s69, %s85
      %p87 = scmp.eq.s32.totalorder %s35, 0
      %p88 = por %p86, %p87
      %s89 = ssub.s32 %s29, %s36
      %p90 = scmp.eq.s32.totalorder %s89, 0
      %s92 = sadd.s32 %s91, 1
      %s93 = scalar_select %p90, %s91, %s92
      %p96 = pneg %p90
      %p97 = scmp.eq.s32.totalorder %s29, 1
      %p98 = por %p96, %p97
      %p99 = scmp.ne.s32.totalorder %s91, %s94
      %p100 = scmp.eq.s32.totalorder %s29, 0
      %p101 = por %p99, %p100
      %p102 = scmp.ne.s32.totalorder %s91, %s94
      %p103 = scmp.eq.s32.totalorder %s34, 1
      %p104 = por %p102, %p103
      %p105 = scmp.ne.s32.totalorder %s94, %s95
      %p106 = scmp.eq.s32.totalorder %s34, 0
      %p107 = por %p105, %p106
      %p108 = scmp.ne.s32.totalorder %s94, %s95
      %p109 = scmp.eq.s32.totalorder %s35, 1
      %p110 = por %p108, %p109
      %p112 = scmp.ne.s32.totalorder %s95, %s111
      %p113 = scmp.eq.s32.totalorder %s35, 0
      %p114 = por %p112, %p113
      %s115 = ssub.s32 %s29, %s36
      %p116 = scmp.eq.s32.totalorder %s115, 0
      %s118 = sadd.s32 %s117, 1
      %s119 = scalar_select %p116, %s117, %s118
      %p122 = pneg %p116
      %p123 = scmp.eq.s32.totalorder %s29, 1
      %p124 = por %p122, %p123
      %p125 = scmp.ne.s32.totalorder %s117, %s120
      %p126 = scmp.eq.s32.totalorder %s29, 0
      %p127 = por %p125, %p126
      %p128 = scmp.ne.s32.totalorder %s117, %s120
      %p129 = scmp.eq.s32.totalorder %s34, 1
      %p130 = por %p128, %p129
      %p131 = scmp.ne.s32.totalorder %s120, %s121
      %p132 = scmp.eq.s32.totalorder %s34, 0
      %p133 = por %p131, %p132
      %p134 = scmp.ne.s32.totalorder %s120, %s121
      %p135 = scmp.eq.s32.totalorder %s35, 1
      %p136 = por %p134, %p135
      %p138 = scmp.ne.s32.totalorder %s121, %s137
      %p139 = scmp.eq.s32.totalorder %s35, 0
      %p140 = por %p138, %p139
      %s141 = ssub.s32 %s29, %s36
      %p142 = scmp.eq.s32.totalorder %s141, 0
      %s144 = sadd.s32 %s143, 1
      %s145 = scalar_select %p142, %s143, %s144
      %p148 = pneg %p142
      %p149 = scmp.eq.s32.totalorder %s29, 1
      %p150 = por %p148, %p149
      %p151 = scmp.ne.s32.totalorder %s143, %s146
      %p152 = scmp.eq.s32.totalorder %s29, 0
      %p153 = por %p151, %p152
      %p154 = scmp.ne.s32.totalorder %s143, %s146
      %p155 = scmp.eq.s32.totalorder %s34, 1
      %p156 = por %p154, %p155
      %p157 = scmp.ne.s32.totalorder %s146, %s147
      %p158 = scmp.eq.s32.totalorder %s34, 0
      %p159 = por %p157, %p158
      %p160 = scmp.ne.s32.totalorder %s146, %s147
      %p161 = scmp.eq.s32.totalorder %s35, 1
      %p162 = por %p160, %p161
      %p164 = scmp.ne.s32.totalorder %s147, %s163
      %p165 = scmp.eq.s32.totalorder %s35, 0
      %p166 = por %p164, %p165
      %s168 = sadd.s32 %s167, 1
      %p171 = scmp.eq.s32.totalorder %s29, 1
      %p172 = scmp.ne.s32.totalorder %s167, %s169
      %p173 = scmp.eq.s32.totalorder %s29, 0
      %p174 = por %p172, %p173
      %p175 = scmp.ne.s32.totalorder %s167, %s169
      %p176 = scmp.eq.s32.totalorder %s34, 1
      %p177 = por %p175, %p176
      %p178 = scmp.ne.s32.totalorder %s169, %s170
      %p179 = scmp.eq.s32.totalorder %s34, 0
      %p180 = por %p178, %p179
      %p181 = scmp.ne.s32.totalorder %s169, %s170
      %p182 = scmp.eq.s32.totalorder %s35, 1
      %p183 = por %p181, %p182
      %p185 = scmp.ne.s32.totalorder %s170, %s184
      %p186 = scmp.eq.s32.totalorder %s35, 0
      %p187 = por %p185, %p186
      %s189 = sadd.s32 %s188, 1
      %p192 = scmp.eq.s32.totalorder %s29, 1
      %p193 = scmp.ne.s32.totalorder %s188, %s190
      %p194 = scmp.eq.s32.totalorder %s29, 0
      %p195 = por %p193, %p194
      %p196 = scmp.ne.s32.totalorder %s188, %s190
      %p197 = scmp.eq.s32.totalorder %s34, 1
      %p198 = por %p196, %p197
      %p199 = scmp.ne.s32.totalorder %s190, %s191
      %p200 = scmp.eq.s32.totalorder %s34, 0
      %p201 = por %p199, %p200
      %p202 = scmp.ne.s32.totalorder %s190, %s191
      %p203 = scmp.eq.s32.totalorder %s35, 1
      %p204 = por %p202, %p203
      %p206 = scmp.ne.s32.totalorder %s191, %s205
      %p207 = scmp.eq.s32.totalorder %s35, 0
      %p208 = por %p206, %p207
      %s210 = sadd.s32 %s209, 1
      %p213 = scmp.eq.s32.totalorder %s29, 1
      %p214 = scmp.ne.s32.totalorder %s209, %s211
      %p215 = scmp.eq.s32.totalorder %s29, 0
      %p216 = por %p214, %p215
      %p217 = scmp.ne.s32.totalorder %s209, %s211
      %p218 = scmp.eq.s32.totalorder %s34, 1
      %p219 = por %p217, %p218
      %p220 = scmp.ne.s32.totalorder %s211, %s212
      %p221 = scmp.eq.s32.totalorder %s34, 0
      %p222 = por %p220, %p221
      %p223 = scmp.ne.s32.totalorder %s211, %s212
      %p224 = scmp.eq.s32.totalorder %s35, 1
      %p225 = por %p223, %p224
      %p227 = scmp.ne.s32.totalorder %s212, %s226
      %p228 = scmp.eq.s32.totalorder %s35, 0
      %p229 = por %p227, %p228
      %s231 = sadd.s32 %s230, 1
      %p234 = scmp.eq.s32.totalorder %s29, 1
      %p235 = scmp.ne.s32.totalorder %s230, %s232
      %p236 = scmp.eq.s32.totalorder %s29, 0
      %p237 = por %p235, %p236
      %p238 = scmp.ne.s32.totalorder %s230, %s232
      %p239 = scmp.eq.s32.totalorder %s34, 1
      %p240 = por %p238, %p239
      %p241 = scmp.ne.s32.totalorder %s232, %s233
      %p242 = scmp.eq.s32.totalorder %s34, 0
      %p243 = por %p241, %p242
      %p244 = scmp.ne.s32.totalorder %s232, %s233
      %p245 = scmp.eq.s32.totalorder %s35, 1
      %p246 = por %p244, %p245
      %p248 = scmp.ne.s32.totalorder %s233, %s247
      %p249 = scmp.eq.s32.totalorder %s35, 0
      %p250 = por %p248, %p249
      %s252 = sadd.s32 %s251, 1
      %p255 = scmp.eq.s32.totalorder %s29, 1
      %p256 = scmp.ne.s32.totalorder %s251, %s253
      %p257 = scmp.eq.s32.totalorder %s29, 0
      %p258 = por %p256, %p257
      %p259 = scmp.ne.s32.totalorder %s251, %s253
      %p260 = scmp.eq.s32.totalorder %s34, 1
      %p261 = por %p259, %p260
      %p262 = scmp.ne.s32.totalorder %s253, %s254
      %p263 = scmp.eq.s32.totalorder %s34, 0
      %p264 = por %p262, %p263
      %p265 = scmp.ne.s32.totalorder %s253, %s254
      %p266 = scmp.eq.s32.totalorder %s35, 1
      %p267 = por %p265, %p266
      %p269 = scmp.ne.s32.totalorder %s254, %s268
      %p270 = scmp.eq.s32.totalorder %s35, 0
      %p271 = por %p269, %p270
      %s273 = sadd.s32 %s272, 1
      %p276 = scmp.eq.s32.totalorder %s29, 1
      %p277 = scmp.ne.s32.totalorder %s272, %s274
      %p278 = scmp.eq.s32.totalorder %s29, 0
      %p279 = por %p277, %p278
      %p280 = scmp.ne.s32.totalorder %s272, %s274
      %p281 = scmp.eq.s32.totalorder %s34, 1
      %p282 = por %p280, %p281
      %p283 = scmp.ne.s32.totalorder %s274, %s275
      %p284 = scmp.eq.s32.totalorder %s34, 0
      %p285 = por %p283, %p284
      %p286 = scmp.ne.s32.totalorder %s274, %s275
      %p287 = scmp.eq.s32.totalorder %s35, 1
      %p288 = por %p286, %p287
      %p290 = scmp.ne.s32.totalorder %s275, %s289
      %p291 = scmp.eq.s32.totalorder %s35, 0
      %p292 = por %p290, %p291
      %s293 = ssub.s32 %s29, %s36
      %p294 = scmp.eq.s32.totalorder %s293, 0
      %s296 = sadd.s32 %s295, 1
      %s297 = scalar_select %p294, %s295, %s296
      %p300 = pneg %p294
      %p301 = scmp.eq.s32.totalorder %s29, 1
      %p302 = por %p300, %p301
      %p303 = scmp.ne.s32.totalorder %s295, %s298
      %p304 = scmp.eq.s32.totalorder %s29, 0
      %p305 = por %p303, %p304
      %p306 = scmp.ne.s32.totalorder %s295, %s298
      %p307 = scmp.eq.s32.totalorder %s34, 1
      %p308 = por %p306, %p307
      %p309 = scmp.ne.s32.totalorder %s298, %s299
      %p310 = scmp.eq.s32.totalorder %s34, 0
      %p311 = por %p309, %p310
      %p312 = scmp.ne.s32.totalorder %s298, %s299
      %p313 = scmp.eq.s32.totalorder %s35, 1
      %p314 = por %p312, %p313
      %p316 = scmp.ne.s32.totalorder %s299, %s315
      %p317 = scmp.eq.s32.totalorder %s35, 0
      %p318 = por %p316, %p317
      %s319 = ssub.s32 %s29, %s36
      %p320 = scmp.eq.s32.totalorder %s319, 0
      %s322 = sadd.s32 %s321, 1
      %s323 = scalar_select %p320, %s321, %s322
      %p326 = pneg %p320
      %p327 = scmp.eq.s32.totalorder %s29, 1
      %p328 = por %p326, %p327
      %p329 = scmp.ne.s32.totalorder %s321, %s324
      %p330 = scmp.eq.s32.totalorder %s29, 0
      %p331 = por %p329, %p330
      %p332 = scmp.ne.s32.totalorder %s321, %s324
      %p333 = scmp.eq.s32.totalorder %s34, 1
      %p334 = por %p332, %p333
      %p335 = scmp.ne.s32.totalorder %s324, %s325
      %p336 = scmp.eq.s32.totalorder %s34, 0
      %p337 = por %p335, %p336
      %p338 = scmp.ne.s32.totalorder %s324, %s325
      %p339 = scmp.eq.s32.totalorder %s35, 1
      %p340 = por %p338, %p339
      %p342 = scmp.ne.s32.totalorder %s325, %s341
      %p343 = scmp.eq.s32.totalorder %s35, 0
      %p344 = por %p342, %p343
      %p345 = scmp.le.s32.totalorder 1, %s29
      %p346 = scmp.lt.s32.totalorder %s29, 3
      %p347 = pnand %p345, %p346
      %p348 = pneg %p347
      // Predicated region
      $region9: #{tpu_custom_call.1} parent=5 // pred_check
        _
      $region10: #{tpu_custom_call.1} parent=5 // pred_check_branch
        %350 = sbr.rel (%p347) target = $region12
      $region11: #{tpu_custom_call.1} parent=5 // pred_region
        %s351 = ssub.s32 %s29, 1
        // Predicated region
        $region13: #{tpu_custom_call.1} parent=11 // pred_check
          %p352 = pneg %p180
        $region14: #{tpu_custom_call.1} parent=11 // pred_check_branch
          %354 = sbr.rel (%p352) target = $region16
        $region15: #{tpu_custom_call.1} parent=11 // pred_region
          %s356 = ssub.s32 4096, 4096
          %357 = vsyncadd [#allocation6], %s356
          %s358 = sshll.u32 [#allocation5], 4
          %s359 = int_to_ptr.vmem [resolvable:$true] %s358
          %364 = dma.hbm_to_vmem [thread:$0]  %s5, 4096, %s359, [#allocation6], 256, 256, 16
        $region16: #{tpu_custom_call.1} parent=11 // pred_fallthru
          _
        // Predicated region
        $region17: #{tpu_custom_call.1} parent=11 // pred_check
          %p365 = pneg %p201
        $region18: #{tpu_custom_call.1} parent=11 // pred_check_branch
          %367 = sbr.rel (%p365) target = $region20
        $region19: #{tpu_custom_call.1} parent=11 // pred_region
          _
        $region20: #{tpu_custom_call.1} parent=11 // pred_fallthru
          _
        // Predicated region
        $region21: #{tpu_custom_call.1} parent=11 // pred_check
          %p368 = pneg %p222
        $region22: #{tpu_custom_call.1} parent=11 // pred_check_branch
          %370 = sbr.rel (%p368) target = $region24
        $region23: #{tpu_custom_call.1} parent=11 // pred_region
          _
        $region24: #{tpu_custom_call.1} parent=11 // pred_fallthru
          _
        // Predicated region
        $region25: #{tpu_custom_call.1} parent=11 // pred_check
          %p371 = pneg %p243
        $region26: #{tpu_custom_call.1} parent=11 // pred_check_branch
          %373 = sbr.rel (%p371) target = $region28
        $region27: #{tpu_custom_call.1} parent=11 // pred_region
          _
        $region28: #{tpu_custom_call.1} parent=11 // pred_fallthru
          _
        // Predicated region
        $region29: #{tpu_custom_call.1} parent=11 // pred_check
          %p374 = pneg %p264
        $region30: #{tpu_custom_call.1} parent=11 // pred_check_branch
          %376 = sbr.rel (%p374) target = $region32
        $region31: #{tpu_custom_call.1} parent=11 // pred_region
          %s378 = ssub.s32 512, 512
          %379 = vsyncadd [#allocation6], %s378
          %s380 = sshll.u32 [#allocation7], 4
          %s381 = int_to_ptr.vmem [resolvable:$true] %s380
          %386 = dma.hbm_to_vmem [thread:$0]  %s9, 512, %s381, [#allocation6], 128, 128, 8
        $region32: #{tpu_custom_call.1} parent=11 // pred_fallthru
          _
        // Predicated region
        $region33: #{tpu_custom_call.1} parent=11 // pred_check
          %p387 = pneg %p285
        $region34: #{tpu_custom_call.1} parent=11 // pred_check_branch
          %389 = sbr.rel (%p387) target = $region36
        $region35: #{tpu_custom_call.1} parent=11 // pred_region
          _
        $region36: #{tpu_custom_call.1} parent=11 // pred_fallthru
          _
      $region12: #{tpu_custom_call.1} parent=5 // pred_fallthru
        _
      %p390 = scmp.lt.s32.totalorder %s29, 2
      // Predicated region
      $region37: #{tpu_custom_call.1} parent=5 // pred_check
        %p391 = pneg %p390
      $region38: #{tpu_custom_call.1} parent=5 // pred_check_branch
        %393 = sbr.rel (%p391) target = $region40
      $region39: #{tpu_custom_call.1} parent=5 // pred_region
        // Predicated region
        $region41: #{tpu_custom_call.1} parent=39 // pred_check
          %p394 = pneg %p49
        $region42: #{tpu_custom_call.1} parent=39 // pred_check_branch
          %396 = sbr.rel (%p394) target = $region44
        $region43: #{tpu_custom_call.1} parent=39 // pred_region
          %s397 = smul.u32 2, %s29
          %p398 = scmp.lt.s32.totalorder %s397, 3
          %s399 = scalar_select %p398, %s397, 3
          %s400 = smul.addr %s399, 8
          %s401 = scalar_lea.vmem %s0, %s400
          %s402 = smul.u32 2, %s29
        $region44: #{tpu_custom_call.1} parent=39 // pred_fallthru
          _
        // Predicated region
        $region45: #{tpu_custom_call.1} parent=39 // pred_check
          %p403 = pneg %p75
        $region46: #{tpu_custom_call.1} parent=39 // pred_check_branch
          %405 = sbr.rel (%p403) target = $region48
        $region47: #{tpu_custom_call.1} parent=39 // pred_region
          %s406 = smul.u32 2, %s29
          %p407 = scmp.lt.s32.totalorder %s406, 3
          %s408 = scalar_select %p407, %s406, 3
          %s409 = smul.addr %s408, 2
          %s410 = smul.addr %s409, 4
          %s411 = scalar_lea.vmem %s1, %s410
          %s412 = smul.u32 2, %s29
        $region48: #{tpu_custom_call.1} parent=39 // pred_fallthru
          _
        // Predicated region
        $region49: #{tpu_custom_call.1} parent=39 // pred_check
          %p413 = pneg %p101
        $region50: #{tpu_custom_call.1} parent=39 // pred_check_branch
          %415 = sbr.rel (%p413) target = $region52
        $region51: #{tpu_custom_call.1} parent=39 // pred_region
          %s416 = sand.u32 %s91, 1
          %s417 = scalar_lea.sflag [#allocation3], %s416
          %s418 = sand.u32 %s91, 1
          %s419 = smul.addr %s418, 8
          %s420 = scalar_lea.vmem [#allocation2], %s419
          %s421 = smul.u32 2, %s29
          %s423 = ssub.s32 128, 128
          %424 = vsyncadd %s417, %s423
          %s425 = smul.addr %s421, 64
          %s426 = scalar_lea.hbm %s2, %s425
          %s427 = sshll.u32 %s420, 4
          %s428 = int_to_ptr.vmem [resolvable:$true] %s427
          %433 = dma.hbm_to_vmem [thread:$0]  %s426, 128, %s428, %s417, 64, 64, 4
        $region52: #{tpu_custom_call.1} parent=39 // pred_fallthru
          _
        // Predicated region
        $region53: #{tpu_custom_call.1} parent=39 // pred_check
          %p434 = pneg %p127
        $region54: #{tpu_custom_call.1} parent=39 // pred_check_branch
          %436 = sbr.rel (%p434) target = $region56
        $region55: #{tpu_custom_call.1} parent=39 // pred_region
          %s437 = smul.u32 2, %s29
          %p438 = scmp.lt.s32.totalorder %s437, 3
          %s439 = scalar_select %p438, %s437, 3
          %s440 = smul.addr %s439, 8
          %s441 = scalar_lea.vmem %s3, %s440
          %s442 = smul.u32 2, %s29
        $region56: #{tpu_custom_call.1} parent=39 // pred_fallthru
          _
        // Predicated region
        $region57: #{tpu_custom_call.1} parent=39 // pred_check
          %p443 = pneg %p153
        $region58: #{tpu_custom_call.1} parent=39 // pred_check_branch
          %445 = sbr.rel (%p443) target = $region60
        $region59: #{tpu_custom_call.1} parent=39 // pred_region
          %s446 = smul.u32 2, %s29
          %p447 = scmp.lt.s32.totalorder %s446, 3
          %s448 = scalar_select %p447, %s446, 3
          %s449 = smul.addr %s448, 8
          %s450 = scalar_lea.vmem %s4, %s449
          %s451 = smul.u32 2, %s29
        $region60: #{tpu_custom_call.1} parent=39 // pred_fallthru
          _
      $region40: #{tpu_custom_call.1} parent=5 // pred_fallthru
        _
      %p452 = scmp.le.s32.totalorder 1, %s29
      %p453 = scmp.lt.s32.totalorder %s29, 3
      %p454 = pnand %p452, %p453
      %p455 = pneg %p454
      // Predicated region
      $region61: #{tpu_custom_call.1} parent=5 // pred_check
        _
      $region62: #{tpu_custom_call.1} parent=5 // pred_check_branch
        %457 = sbr.rel (%p454) target = $region64
      $region63: #{tpu_custom_call.1} parent=5 // pred_region
        %s458 = ssub.s32 %s29, 1
        %s459 = sand.u32 %s94, 1
        %s460 = scalar_lea.sflag [#allocation3], %s459
        %s461 = sand.u32 %s94, 1
        %s462 = smul.addr %s461, 8
        %s463 = scalar_lea.vmem [#allocation2], %s462
        // Predicated region
        $region65: #{tpu_custom_call.1} parent=63 // pred_check
          %p464 = pneg %p107
        $region66: #{tpu_custom_call.1} parent=63 // pred_check_branch
          %466 = sbr.rel (%p464) target = $region68
        $region67: #{tpu_custom_call.1} parent=63 // pred_region
          %467 = dma.done %s460, 128
        $region68: #{tpu_custom_call.1} parent=63 // pred_fallthru
          _
        // Predicated region
        $region69: #{tpu_custom_call.1} parent=63 // pred_check
          %p468 = pneg %p180
        $region70: #{tpu_custom_call.1} parent=63 // pred_check_branch
          %470 = sbr.rel (%p468) target = $region72
        $region71: #{tpu_custom_call.1} parent=63 // pred_region
          %471 = dma.done [#allocation6], 4096
        $region72: #{tpu_custom_call.1} parent=63 // pred_fallthru
          _
        // Predicated region
        $region73: #{tpu_custom_call.1} parent=63 // pred_check
          %p472 = pneg %p264
        $region74: #{tpu_custom_call.1} parent=63 // pred_check_branch
          %474 = sbr.rel (%p472) target = $region76
        $region75: #{tpu_custom_call.1} parent=63 // pred_region
          %475 = dma.done [#allocation6], 512
        $region76: #{tpu_custom_call.1} parent=63 // pred_fallthru
          _
        %s476 = smul.u32 2, %s34
        %p477 = scmp.lt.s32.totalorder %s476, 3
        %s478 = scalar_select %p477, %s476, 3
        %s479 = smul.addr %s478, 8
        %s480 = scalar_lea.vmem %s0, %s479
        %p481 = pneg %p55
        %p482 = pneg %p52
        %s483 = smul.u32 2, %s34
        %p484 = scmp.lt.s32.totalorder %s483, 3
        %s485 = scalar_select %p484, %s483, 3
        %s486 = smul.addr %s485, 2
        %s487 = smul.addr %s486, 4
        %s488 = scalar_lea.vmem %s1, %s487
        %p489 = pneg %p81
        %p490 = pneg %p78
        %s491 = sand.u32 %s94, 1
        %s492 = scalar_lea.sflag [#allocation3], %s491
        %s493 = sand.u32 %s94, 1
        %s494 = smul.addr %s493, 8
        %s495 = scalar_lea.vmem [#allocation2], %s494
        %p496 = pneg %p107
        %p497 = pneg %p104
        %s498 = smul.u32 2, %s34
        %p499 = scmp.lt.s32.totalorder %s498, 3
        %s500 = scalar_select %p499, %s498, 3
        %s501 = smul.addr %s500, 8
        %s502 = scalar_lea.vmem %s3, %s501
        %p503 = pneg %p133
        %p504 = pneg %p130
        %s505 = smul.u32 2, %s34
        %p506 = scmp.lt.s32.totalorder %s505, 3
        %s507 = scalar_select %p506, %s505, 3
        %s508 = smul.addr %s507, 8
        %s509 = scalar_lea.vmem %s4, %s508
        %p510 = pneg %p159
        %p511 = pneg %p156
        %p512 = pneg %p180
        %p513 = pneg %p177
        %p514 = pneg %p201
        %p515 = pneg %p198
        %p516 = pneg %p222
        %p517 = pneg %p219
        %p518 = pneg %p243
        %p519 = pneg %p240
        %p520 = pneg %p264
        %p521 = pneg %p261
        %p522 = pneg %p285
        %p523 = pneg %p282
        %p524 = pneg %p311
        %p525 = pneg %p308
        %s526 = sand.u32 %s298, 1
        %s527 = scalar_lea.sflag [#allocation4], %s526
        %s528 = sand.u32 %s298, 1
        %s529 = smul.addr %s528, 16
        %s530 = scalar_lea.vmem [#allocation8], %s529
        %p531 = pneg %p337
        %p532 = pneg %p334
        %s533 = sand.u32 %s324, 1
        %s534 = scalar_lea.sflag [#allocation10], %s533
        %s535 = sand.u32 %s324, 1
        %s536 = smul.addr %s535, 32
        %s537 = scalar_lea.vmem [#allocation9], %s536
        %s538 = smul.u32 2, %s34
        %p539 = scmp.lt.s32.totalorder %s538, 3
        %s540 = scalar_select %p539, %s538, 3
        %s541 = smul.addr %s540, 8
        %s542 = scalar_lea.vmem %s0, %s541
        %s543 = smul.u32 2, %s34
        %s544 = smul.u32 2, %s34
        %p545 = scmp.lt.s32.totalorder %s544, 3
        %s546 = scalar_select %p545, %s544, 3
        %s547 = smul.addr %s546, 2
        %s548 = smul.addr %s547, 4
        %s549 = scalar_lea.vmem %s1, %s548
        %s550 = smul.u32 2, %s34
        %s551 = smul.u32 2, %s34
        %s552 = smul.u32 2, %s34
        %p553 = scmp.lt.s32.totalorder %s552, 3
        %s554 = scalar_select %p553, %s552, 3
        %s555 = smul.addr %s554, 8
        %s556 = scalar_lea.vmem %s3, %s555
        %s557 = smul.u32 2, %s34
        %s558 = smul.u32 2, %s34
        %p559 = scmp.lt.s32.totalorder %s558, 3
        %s560 = scalar_select %p559, %s558, 3
        %s561 = smul.addr %s560, 8
        %s562 = scalar_lea.vmem %s4, %s561
        %s563 = smul.u32 2, %s34
        %s564 = smul.u32 2, %s34
        %s565 = smul.u32 2, %s34
        %v567 = vld [vmem:[%s542] sm:$0xff]
        %v568 = vld [vmem:[%s542 + $0x8] sm:$0xff]
        %v569 = vld [vmem:[%s7] sm:$0xff]
        %v570 = vld [vmem:[%s7 + $0x8] sm:$0xff]
        %v571 = vld [vmem:[%s7 + $0x10] sm:$0xff]
        %v572 = vld [vmem:[%s7 + $0x18] sm:$0xff]
        %v573 = vld [vmem:[%s8] sm:$0x1]
        %v575 = vlaneseq
        %v576 = vshrl.u32 %v575, 7
        %v577 = vsub.s32 0, %v576
        %v578 = vrot.slane %v573, %v577
        %vm580 = vcmask 261120
        %v582 = vsel %vm580, %v567, 0
        %v585 = vsel %vm580, %v568, 0
        %587 = vmatprep.subr.mxu0 0.0
        %588 = vmatpush1.msra.mxu0 %v569
        %589 = vmatprep.subr.mxu0 0.0
        %590 = vmatpush1.msra.mxu0 %v570
        %591 = vmatprep.subr.mxu0 0.0
        %592 = vmatpush1.msra.mxu0 %v571
        %593 = vmatprep.subr.mxu0 0.0
        %594 = vmatpush1.msra.mxu0 %v572
        %595 = vmatprep.subr.mxu0 0.0
        %596 = vmatpush1.msra.mxu0 0.0
        %597 = vmatprep.subr.mxu0 0.0
        %598 = vmatpush1.msra.mxu0 0.0
        %599 = vmatprep.subr.mxu0 0.0
        %600 = vmatpush1.msra.mxu0 0.0
        %601 = vmatprep.subr.mxu0 0.0
        %602 = vmatpush1.msra.mxu0 0.0
        %603 = vmatprep.subr.mxu0 0.0
        %604 = vmatpush1.msra.mxu0 0.0
        %605 = vmatprep.subr.mxu0 0.0
        %606 = vmatpush1.msra.mxu0 0.0
        %607 = vmatprep.subr.mxu0 0.0
        %608 = vmatpush1.msra.mxu0 0.0
        %609 = vmatprep.subr.mxu0 0.0
        %610 = vmatpush1.msra.mxu0 0.0
        %611 = vmatprep.subr.mxu0 0.0
        %612 = vmatpush1.msra.mxu0 0.0
        %613 = vmatprep.subr.mxu0 0.0
        %614 = vmatpush1.msra.mxu0 0.0
        %615 = vmatprep.subr.mxu0 0.0
        %616 = vmatpush1.msra.mxu0 0.0
        %617 = vmatprep.subr.mxu0 0.0
        %618 = vmatpush1.msra.mxu0 0.0
        %619 = vmatprep.subr.mxu0 0.0
        %620 = vmatpush1.msra.mxu0 0.0
        %621 = vmatprep.subr.mxu0 0.0
        %622 = vmatpush1.msra.mxu0 0.0
        %623 = vmatprep.subr.mxu0 0.0
        %624 = vmatpush1.msra.mxu0 0.0
        %625 = vmatprep.subr.mxu0 0.0
        %626 = vmatpush1.msra.mxu0 0.0
        %627 = vmatprep.subr.mxu0 0.0
        %628 = vmatpush1.msra.mxu0 0.0
        %629 = vmatprep.subr.mxu0 0.0
        %630 = vmatpush1.msra.mxu0 0.0
        %631 = vmatprep.subr.mxu0 0.0
        %632 = vmatpush1.msra.mxu0 0.0
        %633 = vmatprep.subr.mxu0 0.0
        %634 = vmatpush1.msra.mxu0 0.0
        %635 = vmatprep.subr.mxu0 0.0
        %636 = vmatpush1.msra.mxu0 0.0
        %637 = vmatprep.subr.mxu0 0.0
        %638 = vmatpush1.msra.mxu0 0.0
        %639 = vmatprep.subr.mxu0 0.0
        %640 = vmatpush1.msra.mxu0 0.0
        %641 = vmatprep.subr.mxu0 0.0
        %642 = vmatpush1.msra.mxu0 0.0
        %643 = vmatprep.subr.mxu0 0.0
        %644 = vmatpush1.msra.mxu0 0.0
        %645 = vmatprep.subr.mxu0 0.0
        %646 = vmatpush1.msra.mxu0 0.0
        %647 = vmatprep.subr.mxu0 0.0
        %648 = vmatpush1.msra.mxu0 0.0
        %649 = vmatprep.subr.mxu0 0.0
        %650 = vmatpush1.msra.mxu0 0.0
        %651 = vmatprep.mubr.f32.mxu0 0.0
        %652 = vmatmul.mubr.f32.gmra.mrb[0].mxu0 %v582
        %v653 = vpop.f32.mrb[0].mxu0
        %v654 = vadd.f32 %v578, %v653
        %v655 = vpop.f32.mrb[0].mxu0
        %656 = vmatprep.mubr.f32.mxu0 0.0
        %657 = vmatmul.mubr.f32.gmra.mrb[0].mxu0 %v585
        %v658 = vpop.f32.mrb[0].mxu0
        %v659 = vadd.f32 %v578, %v658
        %v660 = vpop.f32.mrb[0].mxu0
        %661 = vdwg.mxu0
        %v662 = vmax.f32 %v654, 0.0
        %v663 = vmax.f32 %v659, 0.0
        %v664 = vand.u32 2147483647, %v654
        %v665 = vand.u32 2147483647, %v659
        %v666 = vsub.f32 0.0, %v664
        %v667 = vsub.f32 0.0, %v665
        %v668 = vmul.f32 %v666, 1.442695
        %v669 = vpow.pop %v668
        %v670 = vmul.f32 %v667, 1.442695
        %v671 = vpow.pop %v670
        %v672 = vadd.f32 %v669, 1.0
        %v673 = vlog2.pop %v672
        %v674 = vmul.f32 %v673, 0.6931472
        %v675 = vmul.f32 -0.5, %v669
        %v676 = vadd.f32 %v675, 1.0
        %v677 = vmul.f32 %v676, %v669
        %v678 = vand.u32 2147483647, %v669
        %vm679 = vcmp.lt.f32.partialorder %v678, 0.0004427343
        %v680 = vsel %vm679, %v677, %v674
        %v681 = vadd.f32 %v671, 1.0
        %v682 = vlog2.pop %v681
        %v683 = vmul.f32 %v682, 0.6931472
        %v684 = vmul.f32 -0.5, %v671
        %v685 = vadd.f32 %v684, 1.0
        %v686 = vmul.f32 %v685, %v671
        %v687 = vand.u32 2147483647, %v671
        %vm688 = vcmp.lt.f32.partialorder %v687, 0.0004427343
        %v689 = vsel %vm688, %v686, %v683
        %v690 = vadd.f32 %v662, %v680
        %v691 = vadd.f32 %v663, %v689
        %v692 = vsub.f32 %v690, 0.6931472
        %v693 = vsub.f32 %v691, 0.6931472
        %v694 = vld [vmem:[#allocation7] sm:$0xff]
        %v695 = vld [vmem:[#allocation7 + $0x8] sm:$0xff]
        %v696 = vld [vmem:[#allocation7 + $0x10] sm:$0xff]
        %v697 = vld [vmem:[#allocation7 + $0x18] sm:$0xff]
        %v698 = vld [vmem:[%s10] sm:$0x1]
        %v700 = vlaneseq
        %v701 = vshrl.u32 %v700, 7
        %v702 = vsub.s32 0, %v701
        %v703 = vrot.slane %v698, %v702
        %v706 = vsel %vm580, %v692, 0
        %v709 = vsel %vm580, %v693, 0
        %711 = vmatprep.subr.mxu0 0.0
        %712 = vmatpush1.msra.mxu0 %v694
        %713 = vmatprep.subr.mxu0 0.0
        %714 = vmatpush1.msra.mxu0 %v695
        %715 = vmatprep.subr.mxu0 0.0
        %716 = vmatpush1.msra.mxu0 %v696
        %717 = vmatprep.subr.mxu0 0.0
        %718 = vmatpush1.msra.mxu0 %v697
        %719 = vmatprep.subr.mxu0 0.0
        %720 = vmatpush1.msra.mxu0 0.0
        %721 = vmatprep.subr.mxu0 0.0
        %722 = vmatpush1.msra.mxu0 0.0
        %723 = vmatprep.subr.mxu0 0.0
        %724 = vmatpush1.msra.mxu0 0.0
        %725 = vmatprep.subr.mxu0 0.0
        %726 = vmatpush1.msra.mxu0 0.0
        %727 = vmatprep.subr.mxu0 0.0
        %728 = vmatpush1.msra.mxu0 0.0
        %729 = vmatprep.subr.mxu0 0.0
        %730 = vmatpush1.msra.mxu0 0.0
        %731 = vmatprep.subr.mxu0 0.0
        %732 = vmatpush1.msra.mxu0 0.0
        %733 = vmatprep.subr.mxu0 0.0
        %734 = vmatpush1.msra.mxu0 0.0
        %735 = vmatprep.subr.mxu0 0.0
        %736 = vmatpush1.msra.mxu0 0.0
        %737 = vmatprep.subr.mxu0 0.0
        %738 = vmatpush1.msra.mxu0 0.0
        %739 = vmatprep.subr.mxu0 0.0
        %740 = vmatpush1.msra.mxu0 0.0
        %741 = vmatprep.subr.mxu0 0.0
        %742 = vmatpush1.msra.mxu0 0.0
        %743 = vmatprep.subr.mxu0 0.0
        %744 = vmatpush1.msra.mxu0 0.0
        %745 = vmatprep.subr.mxu0 0.0
        %746 = vmatpush1.msra.mxu0 0.0
        %747 = vmatprep.subr.mxu0 0.0
        %748 = vmatpush1.msra.mxu0 0.0
        %749 = vmatprep.subr.mxu0 0.0
        %750 = vmatpush1.msra.mxu0 0.0
        %751 = vmatprep.subr.mxu0 0.0
        %752 = vmatpush1.msra.mxu0 0.0
        %753 = vmatprep.subr.mxu0 0.0
        %754 = vmatpush1.msra.mxu0 0.0
        %755 = vmatprep.subr.mxu0 0.0
        %756 = vmatpush1.msra.mxu0 0.0
        %757 = vmatprep.subr.mxu0 0.0
        %758 = vmatpush1.msra.mxu0 0.0
        %759 = vmatprep.subr.mxu0 0.0
        %760 = vmatpush1.msra.mxu0 0.0
        %761 = vmatprep.subr.mxu0 0.0
        %762 = vmatpush1.msra.mxu0 0.0
        %763 = vmatprep.subr.mxu0 0.0
        %764 = vmatpush1.msra.mxu0 0.0
        %765 = vmatprep.subr.mxu0 0.0
        %766 = vmatpush1.msra.mxu0 0.0
        %767 = vmatprep.subr.mxu0 0.0
        %768 = vmatpush1.msra.mxu0 0.0
        %769 = vmatprep.subr.mxu0 0.0
        %770 = vmatpush1.msra.mxu0 0.0
        %771 = vmatprep.subr.mxu0 0.0
        %772 = vmatpush1.msra.mxu0 0.0
        %773 = vmatprep.subr.mxu0 0.0
        %774 = vmatpush1.msra.mxu0 0.0
        %775 = vmatprep.mubr.f32.mxu0 0.0
        %776 = vmatmul.mubr.f32.gmra.mrb[0].mxu0 %v706
        %v777 = vpop.f32.mrb[0].mxu0
        %v778 = vadd.f32 %v703, %v777
        %v779 = vpop.f32.mrb[0].mxu0
        %780 = vmatprep.mubr.f32.mxu0 0.0
        %781 = vmatmul.mubr.f32.gmra.mrb[0].mxu0 %v709
        %v782 = vpop.f32.mrb[0].mxu0
        %v783 = vadd.f32 %v703, %v782
        %v784 = vpop.f32.mrb[0].mxu0
        %785 = vdwg.mxu0
        %v786 = vpack.c.bf16 %v783, %v778
        %v787 = vld [vmem:[%s463] sm:$0xf]
        %v788 = vld [vmem:[%s463 + $0x4] sm:$0xf]
        %v789 = vld [vmem:[#allocation5] sm:$0xff]
        %v790 = vld [vmem:[#allocation5 + $0x8] sm:$0xff]
        %v791 = vld [vmem:[#allocation5 + $0x10] sm:$0xff]
        %v792 = vld [vmem:[#allocation5 + $0x18] sm:$0xff]
        %v793 = vld [vmem:[#allocation5 + $0x20] sm:$0xff]
        %v794 = vld [vmem:[#allocation5 + $0x28] sm:$0xff]
        %v795 = vld [vmem:[#allocation5 + $0x30] sm:$0xff]
        %v796 = vld [vmem:[#allocation5 + $0x38] sm:$0xff]
        %v797 = vld [vmem:[#allocation5 + $0x40] sm:$0xff]
        %v798 = vld [vmem:[#allocation5 + $0x48] sm:$0xff]
        %v799 = vld [vmem:[#allocation5 + $0x50] sm:$0xff]
        %v800 = vld [vmem:[#allocation5 + $0x58] sm:$0xff]
        %v801 = vld [vmem:[#allocation5 + $0x60] sm:$0xff]
        %v802 = vld [vmem:[#allocation5 + $0x68] sm:$0xff]
        %v803 = vld [vmem:[#allocation5 + $0x70] sm:$0xff]
        %v804 = vld [vmem:[#allocation5 + $0x78] sm:$0xff]
        %v805 = vld [vmem:[#allocation5 + $0x80] sm:$0xff]
        %v806 = vld [vmem:[#allocation5 + $0x88] sm:$0xff]
        %v807 = vld [vmem:[#allocation5 + $0x90] sm:$0xff]
        %v808 = vld [vmem:[#allocation5 + $0x98] sm:$0xff]
        %v809 = vld [vmem:[#allocation5 + $0xa0] sm:$0xff]
        %v810 = vld [vmem:[#allocation5 + $0xa8] sm:$0xff]
        %v811 = vld [vmem:[#allocation5 + $0xb0] sm:$0xff]
        %v812 = vld [vmem:[#allocation5 + $0xb8] sm:$0xff]
        %v813 = vld [vmem:[#allocation5 + $0xc0] sm:$0xff]
        %v814 = vld [vmem:[#allocation5 + $0xc8] sm:$0xff]
        %v815 = vld [vmem:[#allocation5 + $0xd0] sm:$0xff]
        %v816 = vld [vmem:[#allocation5 + $0xd8] sm:$0xff]
        %v817 = vld [vmem:[#allocation5 + $0xe0] sm:$0xff]
        %v818 = vld [vmem:[#allocation5 + $0xe8] sm:$0xff]
        %v819 = vld [vmem:[#allocation5 + $0xf0] sm:$0xff]
        %v820 = vld [vmem:[#allocation5 + $0xf8] sm:$0xff]
        %v821 = vld [vmem:[%s6] sm:$0x3]
        %v823 = vlaneseq
        %v824 = vshrl.u32 %v823, 7
        %v825 = vsub.s32 0, %v824
        %v826 = vrot.slane %v821, %v825
        %v827 = vlaneseq
        %v828 = vshrl.u32 %v827, 7
        %v829 = vsub.s32 1, %v828
        %v830 = vrot.slane %v821, %v829
        %v835 = vunpack.c.l.b16 %v787
        %v836 = vunpack.c.l.b16 %v788
        %v837 = vpack.c.b16 %v836, %v835
        %839 = vmatprep.subr.mxu0 %v790
        %840 = vmatpush1.msra.mxu0 %v789
        %841 = vmatprep.subr.mxu0 %v792
        %842 = vmatpush1.msra.mxu0 %v791
        %843 = vmatprep.subr.mxu0 %v794
        %844 = vmatpush1.msra.mxu0 %v793
        %845 = vmatprep.subr.mxu0 %v796
        %846 = vmatpush1.msra.mxu0 %v795
        %847 = vmatprep.subr.mxu0 %v798
        %848 = vmatpush1.msra.mxu0 %v797
        %849 = vmatprep.subr.mxu0 %v800
        %850 = vmatpush1.msra.mxu0 %v799
        %851 = vmatprep.subr.mxu0 %v802
        %852 = vmatpush1.msra.mxu0 %v801
        %853 = vmatprep.subr.mxu0 %v804
        %854 = vmatpush1.msra.mxu0 %v803
        %855 = vmatprep.subr.mxu0 %v806
        %856 = vmatpush1.msra.mxu0 %v805
        %857 = vmatprep.subr.mxu0 %v808
        %858 = vmatpush1.msra.mxu0 %v807
        %859 = vmatprep.subr.mxu0 %v810
        %860 = vmatpush1.msra.mxu0 %v809
        %861 = vmatprep.subr.mxu0 %v812
        %862 = vmatpush1.msra.mxu0 %v811
        %863 = vmatprep.subr.mxu0 %v814
        %864 = vmatpush1.msra.mxu0 %v813
        %865 = vmatprep.subr.mxu0 %v816
        %866 = vmatpush1.msra.mxu0 %v815
        %867 = vmatprep.subr.mxu0 %v818
        %868 = vmatpush1.msra.mxu0 %v817
        %869 = vmatprep.subr.mxu0 %v820
        %870 = vmatpush1.msra.mxu0 %v819
        %871 = vmatprep.subr.mxu0 0.0
        %872 = vmatpush1.msra.mxu0 0.0
        %873 = vmatprep.subr.mxu0 0.0
        %874 = vmatpush1.msra.mxu0 0.0
        %875 = vmatprep.subr.mxu0 0.0
        %876 = vmatpush1.msra.mxu0 0.0
        %877 = vmatprep.subr.mxu0 0.0
        %878 = vmatpush1.msra.mxu0 0.0
        %879 = vmatprep.subr.mxu0 0.0
        %880 = vmatpush1.msra.mxu0 0.0
        %881 = vmatprep.subr.mxu0 0.0
        %882 = vmatpush1.msra.mxu0 0.0
        %883 = vmatprep.subr.mxu0 0.0
        %884 = vmatpush1.msra.mxu0 0.0
        %885 = vmatprep.subr.mxu0 0.0
        %886 = vmatpush1.msra.mxu0 0.0
        %887 = vmatprep.subr.mxu0 0.0
        %888 = vmatpush1.msra.mxu0 0.0
        %889 = vmatprep.subr.mxu0 0.0
        %890 = vmatpush1.msra.mxu0 0.0
        %891 = vmatprep.subr.mxu0 0.0
        %892 = vmatpush1.msra.mxu0 0.0
        %893 = vmatprep.subr.mxu0 0.0
        %894 = vmatpush1.msra.mxu0 0.0
        %895 = vmatprep.subr.mxu0 0.0
        %896 = vmatpush1.msra.mxu0 0.0
        %897 = vmatprep.subr.mxu0 0.0
        %898 = vmatpush1.msra.mxu0 0.0
        %899 = vmatprep.subr.mxu0 0.0
        %900 = vmatpush1.msra.mxu0 0.0
        %901 = vmatprep.subr.mxu0 0.0
        %902 = vmatpush1.msra.mxu0 0.0
        %903 = vmatprep.mubr.bf16.mxu0 0
        %904 = vmatmul.mubr.bf16.gmra.mrb[0].mxu0 %v837
        %v905 = vpop.f32.mrb[0].mxu0
        %v906 = vadd.f32 %v826, %v905
        %v907 = vpop.f32.mrb[0].mxu0
        %v908 = vadd.f32 %v830, %v907
        %v909 = vpop.f32.mrb[0].mxu0
        %v910 = vadd.f32 %v826, %v909
        %v911 = vpop.f32.mrb[0].mxu0
        %v912 = vadd.f32 %v830, %v911
        %913 = vdwg.mxu0
        %v914 = vld [vmem:[%s556] sm:$0xff]
        %v915 = vld [vmem:[%s556 + $0x8] sm:$0xff]
        %v916 = vmul.f32 %v914, 0.2
        %v917 = vmul.f32 %v915, 0.2
        %v918 = vmul.f32 %v916, %v916
        %v919 = vmul.f32 %v917, %v917
        %v920 = vmul.f32 %v918, %v916
        %v921 = vmul.f32 %v919, %v917
        %v922 = vmul.f32 %v920, %v920
        %v923 = vmul.f32 %v921, %v921
        %v924 = vmul.f32 %v922, %v920
        %v925 = vmul.f32 %v923, %v921
        %v926 = vmul.f32 %v924, %v916
        %v927 = vmul.f32 %v925, %v917
        %v928 = vmul.f32 %v926, %v916
        %v929 = vmul.f32 %v927, %v917
        %v930 = vmul.f32 %v924, 55.0
        %v931 = vmul.f32 %v925, 55.0
        %v932 = vsub.f32 1.0, %v930
        %v933 = vsub.f32 1.0, %v931
        %v934 = vmul.f32 %v926, 99.0
        %v935 = vmul.f32 %v927, 99.0
        %v936 = vadd.f32 %v932, %v934
        %v937 = vadd.f32 %v933, %v935
        %v938 = vmul.f32 %v928, 45.0
        %v939 = vmul.f32 %v929, 45.0
        %v940 = vsub.f32 %v936, %v938
        %v941 = vsub.f32 %v937, %v939
        %vm942 = vcmp.lt.f32.partialorder %v916, 1.0
        %vm943 = vcmp.lt.f32.partialorder %v917, 1.0
        %v944 = vsel %vm942, %v940, 0.0
        %v945 = vsel %vm943, %v941, 0.0
        %948 = vrot.lane.b32.xlu0 %v914, 120
        %v949 = vpop.permute.xlu0 %948
        %950 = vrot.lane.b32.xlu0 %v915, 120
        %v951 = vpop.permute.xlu0 %950
        %v954 = vmul.f32 %v944, %v949
        %v955 = vmul.f32 %v945, %v951
        %v956 = vld [vmem:[%s562] sm:$0xff]
        %v957 = vld [vmem:[%s562 + $0x8] sm:$0xff]
        %v958 = vlaneseq
        %v959 = vand.u32 %v958, 127
        %v960 = vld [vmem:[%s549] sm:$0xff]
        %v961 = vld [vmem:[%s549 + $0x8] sm:$0xff]
        %v962 = vunpack.c.l.bf16 %v960
        %v963 = vunpack.c.h.bf16 %v960
        %v964 = vunpack.c.l.bf16 %v961
        %v965 = vunpack.c.h.bf16 %v961
        %966 = vset.pattern.permute.xlu0 0
        %967 = vperm.xlu0 %966, %v956
        %v968 = vpop.permute.xlu0 %967
        %969 = vset.pattern.permute.xlu0 0
        %970 = vperm.xlu0 %969, %v957
        %v971 = vpop.permute.xlu0 %970
        %vm972 = vcmp.eq.s32.totalorder %v959, %v968
        %vm973 = vcmp.eq.s32.totalorder %v959, %v971
        %v974 = vsel %vm972, 1, 0
        %v975 = vsel %vm973, 1, 0
        %v976 = vcvt.s32.f32 %v974
        %v977 = vcvt.s32.f32 %v975
        %v978 = vpack.c.bf16 %v977, %v976
        %vm979 = vcmask 130048
        %v981 = vsel %vm979, %v978, 0
        %983 = vmatprep.subr.bf16.mxu0 0
        %984 = vmatpush1.bf16.msra.mxu0 %v786
        %985 = vmatprep.subr.bf16.mxu0 0
        %986 = vmatpush1.bf16.msra.mxu0 0
        %987 = vmatprep.subr.bf16.mxu0 0
        %988 = vmatpush1.bf16.msra.mxu0 0
        %989 = vmatprep.subr.bf16.mxu0 0
        %990 = vmatpush1.bf16.msra.mxu0 0
        %991 = vmatprep.subr.bf16.mxu0 0
        %992 = vmatpush1.bf16.msra.mxu0 0
        %993 = vmatprep.subr.bf16.mxu0 0
        %994 = vmatpush1.bf16.msra.mxu0 0
        %995 = vmatprep.subr.bf16.mxu0 0
        %996 = vmatpush1.bf16.msra.mxu0 0
        %997 = vmatprep.subr.bf16.mxu0 0
        %998 = vmatpush1.bf16.msra.mxu0 0
        %999 = vmatprep.subr.bf16.mxu0 0
        %1000 = vmatpush1.bf16.msra.mxu0 0
        %1001 = vmatprep.subr.bf16.mxu0 0
        %1002 = vmatpush1.bf16.msra.mxu0 0
        %1003 = vmatprep.subr.bf16.mxu0 0
        %1004 = vmatpush1.bf16.msra.mxu0 0
        %1005 = vmatprep.subr.bf16.mxu0 0
        %1006 = vmatpush1.bf16.msra.mxu0 0
        %1007 = vmatprep.subr.bf16.mxu0 0
        %1008 = vmatpush1.bf16.msra.mxu0 0
        %1009 = vmatprep.subr.bf16.mxu0 0
        %1010 = vmatpush1.bf16.msra.mxu0 0
        %1011 = vmatprep.subr.bf16.mxu0 0
        %1012 = vmatpush1.bf16.msra.mxu0 0
        %1013 = vmatprep.subr.bf16.mxu0 0
        %1014 = vmatpush1.bf16.msra.mxu0 0
        %1015 = vmatprep.mubr.bf16.mxu0 0
        %1016 = vmatmul.mubr.bf16.gmra.mrb[0].mxu0 %v981
        %v1017 = vpop.f32.mrb[0].mxu0
        %v1018 = vadd.f32 0.0, %v1017
        %v1019 = vpop.f32.mrb[0].mxu0
        %v1020 = vpop.f32.mrb[0].mxu0
        %v1021 = vadd.f32 0.0, %v1020
        %v1022 = vpop.f32.mrb[0].mxu0
        %1023 = vdwg.mxu0
        %v1024 = vmul.f32 %v778, %v1018
        %v1025 = vmul.f32 %v783, %v1021
        %v1026 = vmul.f32 %v1024, %v906
        %v1027 = vmul.f32 %v1025, %v910
        %1029 = vset.pattern.permute.xlu0 0
        %1030 = vperm.xlu0 %1029, %v954
        %v1031 = vpop.permute.xlu0 %1030
        %1034 = vset.pattern.permute.xlu0 0
        %1035 = vperm.xlu0 %1034, %v955
        %v1036 = vpop.permute.xlu0 %1035
        %v1038 = vmul.f32 %v1026, %v1031
        %v1039 = vmul.f32 %v1027, %v1036
        %v1040 = vadd.f32 %v1038, 0.0
        %v1041 = vadd.f32 %v1039, 0.0
        %v1042 = vadd.f32 %v962, %v1038
        %v1043 = vadd.f32 %v964, %v1039
        %1044 = vst.msk [vmem:[%s537] sm:$0xff] %vm580, %v1042
        %1045 = vst.msk [vmem:[%s537 + $0x10] sm:$0xff] %vm580, %v1043
        %1046 = vset.pattern.permute.xlu0 1
        %1047 = vperm.xlu0 %1046, %v956
        %v1048 = vpop.permute.xlu0 %1047
        %1049 = vset.pattern.permute.xlu0 1
        %1050 = vperm.xlu0 %1049, %v957
        %v1051 = vpop.permute.xlu0 %1050
        %vm1052 = vcmp.eq.s32.totalorder %v959, %v1048
        %vm1053 = vcmp.eq.s32.totalorder %v959, %v1051
        %v1054 = vsel %vm1052, 1, 0
        %v1055 = vsel %vm1053, 1, 0
        %v1056 = vcvt.s32.f32 %v1054
        %v1057 = vcvt.s32.f32 %v1055
        %v1058 = vpack.c.bf16 %v1057, %v1056
        %v1060 = vsel %vm979, %v1058, 0
        %1062 = vmatprep.subr.bf16.mxu0 0
        %1063 = vmatpush1.bf16.msra.mxu0 %v786
        %1064 = vmatprep.subr.bf16.mxu0 0
        %1065 = vmatpush1.bf16.msra.mxu0 0
        %1066 = vmatprep.subr.bf16.mxu0 0
        %1067 = vmatpush1.bf16.msra.mxu0 0
        %1068 = vmatprep.subr.bf16.mxu0 0
        %1069 = vmatpush1.bf16.msra.mxu0 0
        %1070 = vmatprep.subr.bf16.mxu0 0
        %1071 = vmatpush1.bf16.msra.mxu0 0
        %1072 = vmatprep.subr.bf16.mxu0 0
        %1073 = vmatpush1.bf16.msra.mxu0 0
        %1074 = vmatprep.subr.bf16.mxu0 0
        %1075 = vmatpush1.bf16.msra.mxu0 0
        %1076 = vmatprep.subr.bf16.mxu0 0
        %1077 = vmatpush1.bf16.msra.mxu0 0
        %1078 = vmatprep.subr.bf16.mxu0 0
        %1079 = vmatpush1.bf16.msra.mxu0 0
        %1080 = vmatprep.subr.bf16.mxu0 0
        %1081 = vmatpush1.bf16.msra.mxu0 0
        %1082 = vmatprep.subr.bf16.mxu0 0
        %1083 = vmatpush1.bf16.msra.mxu0 0
        %1084 = vmatprep.subr.bf16.mxu0 0
        %1085 = vmatpush1.bf16.msra.mxu0 0
        %1086 = vmatprep.subr.bf16.mxu0 0
        %1087 = vmatpush1.bf16.msra.mxu0 0
        %1088 = vmatprep.subr.bf16.mxu0 0
        %1089 = vmatpush1.bf16.msra.mxu0 0
        %1090 = vmatprep.subr.bf16.mxu0 0
        %1091 = vmatpush1.bf16.msra.mxu0 0
        %1092 = vmatprep.subr.bf16.mxu0 0
        %1093 = vmatpush1.bf16.msra.mxu0 0
        %1094 = vmatprep.mubr.bf16.mxu0 0
        %1095 = vmatmul.mubr.bf16.gmra.mrb[0].mxu0 %v1060
        %v1096 = vpop.f32.mrb[0].mxu0
        %v1097 = vadd.f32 0.0, %v1096
        %v1098 = vpop.f32.mrb[0].mxu0
        %v1099 = vpop.f32.mrb[0].mxu0
        %v1100 = vadd.f32 0.0, %v1099
        %v1101 = vpop.f32.mrb[0].mxu0
        %1102 = vdwg.mxu0
        %v1103 = vmul.f32 %v778, %v1097
        %v1104 = vmul.f32 %v783, %v1100
        %1107 = vrot.lane.b32.xlu0 %v906, 96
        %v1108 = vpop.permute.xlu0 %1107
        %1109 = vrot.lane.b32.xlu0 %v910, 96
        %v1110 = vpop.permute.xlu0 %1109
        %v1113 = vmul.f32 %v1103, %v1108
        %v1114 = vmul.f32 %v1104, %v1110
        %1115 = vset.pattern.permute.xlu0 1
        %1116 = vperm.xlu0 %1115, %v954
        %v1117 = vpop.permute.xlu0 %1116
        %1119 = vset.pattern.permute.xlu0 1
        %1120 = vperm.xlu0 %1119, %v955
        %v1121 = vpop.permute.xlu0 %1120
        %v1123 = vmul.f32 %v1113, %v1117
        %v1124 = vmul.f32 %v1114, %v1121
        %v1125 = vadd.f32 %v1040, %v1123
        %v1126 = vadd.f32 %v1041, %v1124
        %1129 = vrot.lane.b32.xlu0 %v1123, 32
        %v1130 = vpop.permute.xlu0 %1129
        %1131 = vrot.lane.b32.xlu0 %v1124, 32
        %v1132 = vpop.permute.xlu0 %1131
        %v1135 = vadd.f32 %v962, %v1130
        %v1136 = vadd.f32 %v964, %v1132
        %vm1137 = vcmask 523520
        %1138 = vst.msk [vmem:[%s537] sm:$0xff] %vm1137, %v1135
        %1139 = vst.msk [vmem:[%s537 + $0x10] sm:$0xff] %vm1137, %v1136
        %1140 = vset.pattern.permute.xlu0 2
        %1141 = vperm.xlu0 %1140, %v956
        %v1142 = vpop.permute.xlu0 %1141
        %1143 = vset.pattern.permute.xlu0 2
        %1144 = vperm.xlu0 %1143, %v957
        %v1145 = vpop.permute.xlu0 %1144
        %vm1146 = vcmp.eq.s32.totalorder %v959, %v1142
        %vm1147 = vcmp.eq.s32.totalorder %v959, %v1145
        %v1148 = vsel %vm1146, 1, 0
        %v1149 = vsel %vm1147, 1, 0
        %v1150 = vcvt.s32.f32 %v1148
        %v1151 = vcvt.s32.f32 %v1149
        %v1152 = vpack.c.bf16 %v1151, %v1150
        %v1154 = vsel %vm979, %v1152, 0
        %1156 = vmatprep.subr.bf16.mxu0 0
        %1157 = vmatpush1.bf16.msra.mxu0 %v786
        %1158 = vmatprep.subr.bf16.mxu0 0
        %1159 = vmatpush1.bf16.msra.mxu0 0
        %1160 = vmatprep.subr.bf16.mxu0 0
        %1161 = vmatpush1.bf16.msra.mxu0 0
        %1162 = vmatprep.subr.bf16.mxu0 0
        %1163 = vmatpush1.bf16.msra.mxu0 0
        %1164 = vmatprep.subr.bf16.mxu0 0
        %1165 = vmatpush1.bf16.msra.mxu0 0
        %1166 = vmatprep.subr.bf16.mxu0 0
        %1167 = vmatpush1.bf16.msra.mxu0 0
        %1168 = vmatprep.subr.bf16.mxu0 0
        %1169 = vmatpush1.bf16.msra.mxu0 0
        %1170 = vmatprep.subr.bf16.mxu0 0
        %1171 = vmatpush1.bf16.msra.mxu0 0
        %1172 = vmatprep.subr.bf16.mxu0 0
        %1173 = vmatpush1.bf16.msra.mxu0 0
        %1174 = vmatprep.subr.bf16.mxu0 0
        %1175 = vmatpush1.bf16.msra.mxu0 0
        %1176 = vmatprep.subr.bf16.mxu0 0
        %1177 = vmatpush1.bf16.msra.mxu0 0
        %1178 = vmatprep.subr.bf16.mxu0 0
        %1179 = vmatpush1.bf16.msra.mxu0 0
        %1180 = vmatprep.subr.bf16.mxu0 0
        %1181 = vmatpush1.bf16.msra.mxu0 0
        %1182 = vmatprep.subr.bf16.mxu0 0
        %1183 = vmatpush1.bf16.msra.mxu0 0
        %1184 = vmatprep.subr.bf16.mxu0 0
        %1185 = vmatpush1.bf16.msra.mxu0 0
        %1186 = vmatprep.subr.bf16.mxu0 0
        %1187 = vmatpush1.bf16.msra.mxu0 0
        %1188 = vmatprep.mubr.bf16.mxu0 0
        %1189 = vmatmul.mubr.bf16.gmra.mrb[0].mxu0 %v1154
        %v1190 = vpop.f32.mrb[0].mxu0
        %v1191 = vadd.f32 0.0, %v1190
        %v1192 = vpop.f32.mrb[0].mxu0
        %v1193 = vpop.f32.mrb[0].mxu0
        %v1194 = vadd.f32 0.0, %v1193
        %v1195 = vpop.f32.mrb[0].mxu0
        %1196 = vdwg.mxu0
        %v1197 = vmul.f32 %v778, %v1191
        %v1198 = vmul.f32 %v783, %v1194
        %1199 = vrot.lane.b32.xlu0 %v906, 64
        %v1200 = vpop.permute.xlu0 %1199
        %1201 = vrot.lane.b32.xlu0 %v910, 64
        %v1202 = vpop.permute.xlu0 %1201
        %v1205 = vmul.f32 %v1197, %v1200
        %v1206 = vmul.f32 %v1198, %v1202
        %1207 = vset.pattern.permute.xlu0 2
        %1208 = vperm.xlu0 %1207, %v954
        %v1209 = vpop.permute.xlu0 %1208
        %1211 = vset.pattern.permute.xlu0 2
        %1212 = vperm.xlu0 %1211, %v955
        %v1213 = vpop.permute.xlu0 %1212
        %v1215 = vmul.f32 %v1205, %v1209
        %v1216 = vmul.f32 %v1206, %v1213
        %v1217 = vadd.f32 %v1125, %v1215
        %v1218 = vadd.f32 %v1126, %v1216
        %1221 = vrot.lane.b32.xlu0 %v1215, 64
        %v1222 = vpop.permute.xlu0 %1221
        %1223 = vrot.lane.b32.xlu0 %v1216, 64
        %v1224 = vpop.permute.xlu0 %1223
        %v1227 = vadd.f32 %v962, %v1222
        %v1228 = vadd.f32 %v964, %v1224
        %vm1229 = vcmask 785920
        %1230 = vst.msk [vmem:[%s537] sm:$0xff] %vm1229, %v1227
        %1231 = vst.msk [vmem:[%s537 + $0x10] sm:$0xff] %vm1229, %v1228
        %1232 = vset.pattern.permute.xlu0 3
        %1233 = vperm.xlu0 %1232, %v956
        %v1234 = vpop.permute.xlu0 %1233
        %1235 = vset.pattern.permute.xlu0 3
        %1236 = vperm.xlu0 %1235, %v957
        %v1237 = vpop.permute.xlu0 %1236
        %vm1238 = vcmp.eq.s32.totalorder %v959, %v1234
        %vm1239 = vcmp.eq.s32.totalorder %v959, %v1237
        %v1240 = vsel %vm1238, 1, 0
        %v1241 = vsel %vm1239, 1, 0
        %v1242 = vcvt.s32.f32 %v1240
        %v1243 = vcvt.s32.f32 %v1241
        %v1244 = vpack.c.bf16 %v1243, %v1242
        %v1246 = vsel %vm979, %v1244, 0
        %1248 = vmatprep.subr.bf16.mxu0 0
        %1249 = vmatpush1.bf16.msra.mxu0 %v786
        %1250 = vmatprep.subr.bf16.mxu0 0
        %1251 = vmatpush1.bf16.msra.mxu0 0
        %1252 = vmatprep.subr.bf16.mxu0 0
        %1253 = vmatpush1.bf16.msra.mxu0 0
        %1254 = vmatprep.subr.bf16.mxu0 0
        %1255 = vmatpush1.bf16.msra.mxu0 0
        %1256 = vmatprep.subr.bf16.mxu0 0
        %1257 = vmatpush1.bf16.msra.mxu0 0
        %1258 = vmatprep.subr.bf16.mxu0 0
        %1259 = vmatpush1.bf16.msra.mxu0 0
        %1260 = vmatprep.subr.bf16.mxu0 0
        %1261 = vmatpush1.bf16.msra.mxu0 0
        %1262 = vmatprep.subr.bf16.mxu0 0
        %1263 = vmatpush1.bf16.msra.mxu0 0
        %1264 = vmatprep.subr.bf16.mxu0 0
        %1265 = vmatpush1.bf16.msra.mxu0 0
        %1266 = vmatprep.subr.bf16.mxu0 0
        %1267 = vmatpush1.bf16.msra.mxu0 0
        %1268 = vmatprep.subr.bf16.mxu0 0
        %1269 = vmatpush1.bf16.msra.mxu0 0
        %1270 = vmatprep.subr.bf16.mxu0 0
        %1271 = vmatpush1.bf16.msra.mxu0 0
        %1272 = vmatprep.subr.bf16.mxu0 0
        %1273 = vmatpush1.bf16.msra.mxu0 0
        %1274 = vmatprep.subr.bf16.mxu0 0
        %1275 = vmatpush1.bf16.msra.mxu0 0
        %1276 = vmatprep.subr.bf16.mxu0 0
        %1277 = vmatpush1.bf16.msra.mxu0 0
        %1278 = vmatprep.subr.bf16.mxu0 0
        %1279 = vmatpush1.bf16.msra.mxu0 0
        %1280 = vmatprep.mubr.bf16.mxu0 0
        %1281 = vmatmul.mubr.bf16.gmra.mrb[0].mxu0 %v1246
        %v1282 = vpop.f32.mrb[0].mxu0
        %v1283 = vadd.f32 0.0, %v1282
        %v1284 = vpop.f32.mrb[0].mxu0
        %v1285 = vpop.f32.mrb[0].mxu0
        %v1286 = vadd.f32 0.0, %v1285
        %v1287 = vpop.f32.mrb[0].mxu0
        %1288 = vdwg.mxu0
        %v1289 = vmul.f32 %v778, %v1283
        %v1290 = vmul.f32 %v783, %v1286
        %1291 = vrot.lane.b32.xlu0 %v906, 32
        %v1292 = vpop.permute.xlu0 %1291
        %1293 = vrot.lane.b32.xlu0 %v910, 32
        %v1294 = vpop.permute.xlu0 %1293
        %v1297 = vmul.f32 %v1289, %v1292
        %v1298 = vmul.f32 %v1290, %v1294
        %1299 = vset.pattern.permute.xlu0 3
        %1300 = vperm.xlu0 %1299, %v954
        %v1301 = vpop.permute.xlu0 %1300
        %1303 = vset.pattern.permute.xlu0 3
        %1304 = vperm.xlu0 %1303, %v955
        %v1305 = vpop.permute.xlu0 %1304
        %v1307 = vmul.f32 %v1297, %v1301
        %v1308 = vmul.f32 %v1298, %v1305
        %v1309 = vadd.f32 %v1217, %v1307
        %v1310 = vadd.f32 %v1218, %v1308
        %1313 = vrot.lane.b32.xlu0 %v1307, 96
        %v1314 = vpop.permute.xlu0 %1313
        %1315 = vrot.lane.b32.xlu0 %v1308, 96
        %v1316 = vpop.permute.xlu0 %1315
        %v1319 = vadd.f32 %v962, %v1314
        %v1320 = vadd.f32 %v964, %v1316
        %vm1321 = vcmask 1048320
        %1322 = vst.msk [vmem:[%s537] sm:$0xff] %vm1321, %v1319
        %1323 = vst.msk [vmem:[%s537 + $0x10] sm:$0xff] %vm1321, %v1320
        %1324 = vset.pattern.permute.xlu0 4
        %1325 = vperm.xlu0 %1324, %v956
        %v1326 = vpop.permute.xlu0 %1325
        %1327 = vset.pattern.permute.xlu0 4
        %1328 = vperm.xlu0 %1327, %v957
        %v1329 = vpop.permute.xlu0 %1328
        %vm1330 = vcmp.eq.s32.totalorder %v959, %v1326
        %vm1331 = vcmp.eq.s32.totalorder %v959, %v1329
        %v1332 = vsel %vm1330, 1, 0
        %v1333 = vsel %vm1331, 1, 0
        %v1334 = vcvt.s32.f32 %v1332
        %v1335 = vcvt.s32.f32 %v1333
        %v1336 = vpack.c.bf16 %v1335, %v1334
        %v1338 = vsel %vm979, %v1336, 0
        %1340 = vmatprep.subr.bf16.mxu0 0
        %1341 = vmatpush1.bf16.msra.mxu0 %v786
        %1342 = vmatprep.subr.bf16.mxu0 0
        %1343 = vmatpush1.bf16.msra.mxu0 0
        %1344 = vmatprep.subr.bf16.mxu0 0
        %1345 = vmatpush1.bf16.msra.mxu0 0
        %1346 = vmatprep.subr.bf16.mxu0 0
        %1347 = vmatpush1.bf16.msra.mxu0 0
        %1348 = vmatprep.subr.bf16.mxu0 0
        %1349 = vmatpush1.bf16.msra.mxu0 0
        %1350 = vmatprep.subr.bf16.mxu0 0
        %1351 = vmatpush1.bf16.msra.mxu0 0
        %1352 = vmatprep.subr.bf16.mxu0 0
        %1353 = vmatpush1.bf16.msra.mxu0 0
        %1354 = vmatprep.subr.bf16.mxu0 0
        %1355 = vmatpush1.bf16.msra.mxu0 0
        %1356 = vmatprep.subr.bf16.mxu0 0
        %1357 = vmatpush1.bf16.msra.mxu0 0
        %1358 = vmatprep.subr.bf16.mxu0 0
        %1359 = vmatpush1.bf16.msra.mxu0 0
        %1360 = vmatprep.subr.bf16.mxu0 0
        %1361 = vmatpush1.bf16.msra.mxu0 0
        %1362 = vmatprep.subr.bf16.mxu0 0
        %1363 = vmatpush1.bf16.msra.mxu0 0
        %1364 = vmatprep.subr.bf16.mxu0 0
        %1365 = vmatpush1.bf16.msra.mxu0 0
        %1366 = vmatprep.subr.bf16.mxu0 0
        %1367 = vmatpush1.bf16.msra.mxu0 0
        %1368 = vmatprep.subr.bf16.mxu0 0
        %1369 = vmatpush1.bf16.msra.mxu0 0
        %1370 = vmatprep.subr.bf16.mxu0 0
        %1371 = vmatpush1.bf16.msra.mxu0 0
        %1372 = vmatprep.mubr.bf16.mxu0 0
        %1373 = vmatmul.mubr.bf16.gmra.mrb[0].mxu0 %v1338
        %v1374 = vpop.f32.mrb[0].mxu0
        %v1375 = vadd.f32 0.0, %v1374
        %v1376 = vpop.f32.mrb[0].mxu0
        %v1377 = vpop.f32.mrb[0].mxu0
        %v1378 = vadd.f32 0.0, %v1377
        %v1379 = vpop.f32.mrb[0].mxu0
        %1380 = vdwg.mxu0
        %v1381 = vmul.f32 %v778, %v1375
        %v1382 = vmul.f32 %v783, %v1378
        %v1383 = vmul.f32 %v1381, %v908
        %v1384 = vmul.f32 %v1382, %v912
        %1385 = vset.pattern.permute.xlu0 4
        %1386 = vperm.xlu0 %1385, %v954
        %v1387 = vpop.permute.xlu0 %1386
        %1389 = vset.pattern.permute.xlu0 4
        %1390 = vperm.xlu0 %1389, %v955
        %v1391 = vpop.permute.xlu0 %1390
        %v1393 = vmul.f32 %v1383, %v1387
        %v1394 = vmul.f32 %v1384, %v1391
        %v1395 = vadd.f32 %v1309, %v1393
        %v1396 = vadd.f32 %v1310, %v1394
        %v1397 = vadd.f32 %v963, %v1393
        %v1398 = vadd.f32 %v965, %v1394
        %1399 = vst.msk [vmem:[%s537 + $0x8] sm:$0xff] %vm580, %v1397
        %1400 = vst.msk [vmem:[%s537 + $0x18] sm:$0xff] %vm580, %v1398
        %1401 = vset.pattern.permute.xlu0 5
        %1402 = vperm.xlu0 %1401, %v956
        %v1403 = vpop.permute.xlu0 %1402
        %1404 = vset.pattern.permute.xlu0 5
        %1405 = vperm.xlu0 %1404, %v957
        %v1406 = vpop.permute.xlu0 %1405
        %vm1407 = vcmp.eq.s32.totalorder %v959, %v1403
        %vm1408 = vcmp.eq.s32.totalorder %v959, %v1406
        %v1409 = vsel %vm1407, 1, 0
        %v1410 = vsel %vm1408, 1, 0
        %v1411 = vcvt.s32.f32 %v1409
        %v1412 = vcvt.s32.f32 %v1410
        %v1413 = vpack.c.bf16 %v1412, %v1411
        %v1415 = vsel %vm979, %v1413, 0
        %1417 = vmatprep.subr.bf16.mxu0 0
        %1418 = vmatpush1.bf16.msra.mxu0 %v786
        %1419 = vmatprep.subr.bf16.mxu0 0
        %1420 = vmatpush1.bf16.msra.mxu0 0
        %1421 = vmatprep.subr.bf16.mxu0 0
        %1422 = vmatpush1.bf16.msra.mxu0 0
        %1423 = vmatprep.subr.bf16.mxu0 0
        %1424 = vmatpush1.bf16.msra.mxu0 0
        %1425 = vmatprep.subr.bf16.mxu0 0
        %1426 = vmatpush1.bf16.msra.mxu0 0
        %1427 = vmatprep.subr.bf16.mxu0 0
        %1428 = vmatpush1.bf16.msra.mxu0 0
        %1429 = vmatprep.subr.bf16.mxu0 0
        %1430 = vmatpush1.bf16.msra.mxu0 0
        %1431 = vmatprep.subr.bf16.mxu0 0
        %1432 = vmatpush1.bf16.msra.mxu0 0
        %1433 = vmatprep.subr.bf16.mxu0 0
        %1434 = vmatpush1.bf16.msra.mxu0 0
        %1435 = vmatprep.subr.bf16.mxu0 0
        %1436 = vmatpush1.bf16.msra.mxu0 0
        %1437 = vmatprep.subr.bf16.mxu0 0
        %1438 = vmatpush1.bf16.msra.mxu0 0
        %1439 = vmatprep.subr.bf16.mxu0 0
        %1440 = vmatpush1.bf16.msra.mxu0 0
        %1441 = vmatprep.subr.bf16.mxu0 0
        %1442 = vmatpush1.bf16.msra.mxu0 0
        %1443 = vmatprep.subr.bf16.mxu0 0
        %1444 = vmatpush1.bf16.msra.mxu0 0
        %1445 = vmatprep.subr.bf16.mxu0 0
        %1446 = vmatpush1.bf16.msra.mxu0 0
        %1447 = vmatprep.subr.bf16.mxu0 0
        %1448 = vmatpush1.bf16.msra.mxu0 0
        %1449 = vmatprep.mubr.bf16.mxu0 0
        %1450 = vmatmul.mubr.bf16.gmra.mrb[0].mxu0 %v1415
        %v1451 = vpop.f32.mrb[0].mxu0
        %v1452 = vadd.f32 0.0, %v1451
        %v1453 = vpop.f32.mrb[0].mxu0
        %v1454 = vpop.f32.mrb[0].mxu0
        %v1455 = vadd.f32 0.0, %v1454
        %v1456 = vpop.f32.mrb[0].mxu0
        %1457 = vdwg.mxu0
        %v1458 = vmul.f32 %v778, %v1452
        %v1459 = vmul.f32 %v783, %v1455
        %1462 = vrot.lane.b32.xlu0 %v908, 96
        %v1463 = vpop.permute.xlu0 %1462
        %1464 = vrot.lane.b32.xlu0 %v912, 96
        %v1465 = vpop.permute.xlu0 %1464
        %v1468 = vmul.f32 %v1458, %v1463
        %v1469 = vmul.f32 %v1459, %v1465
        %1470 = vset.pattern.permute.xlu0 5
        %1471 = vperm.xlu0 %1470, %v954
        %v1472 = vpop.permute.xlu0 %1471
        %1474 = vset.pattern.permute.xlu0 5
        %1475 = vperm.xlu0 %1474, %v955
        %v1476 = vpop.permute.xlu0 %1475
        %v1478 = vmul.f32 %v1468, %v1472
        %v1479 = vmul.f32 %v1469, %v1476
        %v1480 = vadd.f32 %v1395, %v1478
        %v1481 = vadd.f32 %v1396, %v1479
        %1484 = vrot.lane.b32.xlu0 %v1478, 32
        %v1485 = vpop.permute.xlu0 %1484
        %1486 = vrot.lane.b32.xlu0 %v1479, 32
        %v1487 = vpop.permute.xlu0 %1486
        %v1490 = vadd.f32 %v963, %v1485
        %v1491 = vadd.f32 %v965, %v1487
        %1492 = vst.msk [vmem:[%s537 + $0x8] sm:$0xff] %vm1137, %v1490
        %1493 = vst.msk [vmem:[%s537 + $0x18] sm:$0xff] %vm1137, %v1491
        %1494 = vset.pattern.permute.xlu0 6
        %1495 = vperm.xlu0 %1494, %v956
        %v1496 = vpop.permute.xlu0 %1495
        %1497 = vset.pattern.permute.xlu0 6
        %1498 = vperm.xlu0 %1497, %v957
        %v1499 = vpop.permute.xlu0 %1498
        %vm1500 = vcmp.eq.s32.totalorder %v959, %v1496
        %vm1501 = vcmp.eq.s32.totalorder %v959, %v1499
        %v1502 = vsel %vm1500, 1, 0
        %v1503 = vsel %vm1501, 1, 0
        %v1504 = vcvt.s32.f32 %v1502
        %v1505 = vcvt.s32.f32 %v1503
        %v1506 = vpack.c.bf16 %v1505, %v1504
        %v1508 = vsel %vm979, %v1506, 0
        %1510 = vmatprep.subr.bf16.mxu0 0
        %1511 = vmatpush1.bf16.msra.mxu0 %v786
        %1512 = vmatprep.subr.bf16.mxu0 0
        %1513 = vmatpush1.bf16.msra.mxu0 0
        %1514 = vmatprep.subr.bf16.mxu0 0
        %1515 = vmatpush1.bf16.msra.mxu0 0
        %1516 = vmatprep.subr.bf16.mxu0 0
        %1517 = vmatpush1.bf16.msra.mxu0 0
        %1518 = vmatprep.subr.bf16.mxu0 0
        %1519 = vmatpush1.bf16.msra.mxu0 0
        %1520 = vmatprep.subr.bf16.mxu0 0
        %1521 = vmatpush1.bf16.msra.mxu0 0
        %1522 = vmatprep.subr.bf16.mxu0 0
        %1523 = vmatpush1.bf16.msra.mxu0 0
        %1524 = vmatprep.subr.bf16.mxu0 0
        %1525 = vmatpush1.bf16.msra.mxu0 0
        %1526 = vmatprep.subr.bf16.mxu0 0
        %1527 = vmatpush1.bf16.msra.mxu0 0
        %1528 = vmatprep.subr.bf16.mxu0 0
        %1529 = vmatpush1.bf16.msra.mxu0 0
        %1530 = vmatprep.subr.bf16.mxu0 0
        %1531 = vmatpush1.bf16.msra.mxu0 0
        %1532 = vmatprep.subr.bf16.mxu0 0
        %1533 = vmatpush1.bf16.msra.mxu0 0
        %1534 = vmatprep.subr.bf16.mxu0 0
        %1535 = vmatpush1.bf16.msra.mxu0 0
        %1536 = vmatprep.subr.bf16.mxu0 0
        %1537 = vmatpush1.bf16.msra.mxu0 0
        %1538 = vmatprep.subr.bf16.mxu0 0
        %1539 = vmatpush1.bf16.msra.mxu0 0
        %1540 = vmatprep.subr.bf16.mxu0 0
        %1541 = vmatpush1.bf16.msra.mxu0 0
        %1542 = vmatprep.mubr.bf16.mxu0 0
        %1543 = vmatmul.mubr.bf16.gmra.mrb[0].mxu0 %v1508
        %v1544 = vpop.f32.mrb[0].mxu0
        %v1545 = vadd.f32 0.0, %v1544
        %v1546 = vpop.f32.mrb[0].mxu0
        %v1547 = vpop.f32.mrb[0].mxu0
        %v1548 = vadd.f32 0.0, %v1547
        %v1549 = vpop.f32.mrb[0].mxu0
        %1550 = vdwg.mxu0
        %v1551 = vmul.f32 %v778, %v1545
        %v1552 = vmul.f32 %v783, %v1548
        %1553 = vrot.lane.b32.xlu0 %v908, 64
        %v1554 = vpop.permute.xlu0 %1553
        %1555 = vrot.lane.b32.xlu0 %v912, 64
        %v1556 = vpop.permute.xlu0 %1555
        %v1559 = vmul.f32 %v1551, %v1554
        %v1560 = vmul.f32 %v1552, %v1556
        %1561 = vset.pattern.permute.xlu0 6
        %1562 = vperm.xlu0 %1561, %v954
        %v1563 = vpop.permute.xlu0 %1562
        %1565 = vset.pattern.permute.xlu0 6
        %1566 = vperm.xlu0 %1565, %v955
        %v1567 = vpop.permute.xlu0 %1566
        %v1569 = vmul.f32 %v1559, %v1563
        %v1570 = vmul.f32 %v1560, %v1567
        %v1571 = vadd.f32 %v1480, %v1569
        %v1572 = vadd.f32 %v1481, %v1570
        %1575 = vrot.lane.b32.xlu0 %v1569, 64
        %v1576 = vpop.permute.xlu0 %1575
        %1577 = vrot.lane.b32.xlu0 %v1570, 64
        %v1578 = vpop.permute.xlu0 %1577
        %v1581 = vadd.f32 %v963, %v1576
        %v1582 = vadd.f32 %v965, %v1578
        %1583 = vst.msk [vmem:[%s537 + $0x8] sm:$0xff] %vm1229, %v1581
        %1584 = vst.msk [vmem:[%s537 + $0x18] sm:$0xff] %vm1229, %v1582
        %1585 = vset.pattern.permute.xlu0 7
        %1586 = vperm.xlu0 %1585, %v956
        %v1587 = vpop.permute.xlu0 %1586
        %1588 = vset.pattern.permute.xlu0 7
        %1589 = vperm.xlu0 %1588, %v957
        %v1590 = vpop.permute.xlu0 %1589
        %vm1591 = vcmp.eq.s32.totalorder %v959, %v1587
        %vm1592 = vcmp.eq.s32.totalorder %v959, %v1590
        %v1593 = vsel %vm1591, 1, 0
        %v1594 = vsel %vm1592, 1, 0
        %v1595 = vcvt.s32.f32 %v1593
        %v1596 = vcvt.s32.f32 %v1594
        %v1597 = vpack.c.bf16 %v1596, %v1595
        %v1599 = vsel %vm979, %v1597, 0
        %1601 = vmatprep.subr.bf16.mxu0 0
        %1602 = vmatpush1.bf16.msra.mxu0 %v786
        %1603 = vmatprep.subr.bf16.mxu0 0
        %1604 = vmatpush1.bf16.msra.mxu0 0
        %1605 = vmatprep.subr.bf16.mxu0 0
        %1606 = vmatpush1.bf16.msra.mxu0 0
        %1607 = vmatprep.subr.bf16.mxu0 0
        %1608 = vmatpush1.bf16.msra.mxu0 0
        %1609 = vmatprep.subr.bf16.mxu0 0
        %1610 = vmatpush1.bf16.msra.mxu0 0
        %1611 = vmatprep.subr.bf16.mxu0 0
        %1612 = vmatpush1.bf16.msra.mxu0 0
        %1613 = vmatprep.subr.bf16.mxu0 0
        %1614 = vmatpush1.bf16.msra.mxu0 0
        %1615 = vmatprep.subr.bf16.mxu0 0
        %1616 = vmatpush1.bf16.msra.mxu0 0
        %1617 = vmatprep.subr.bf16.mxu0 0
        %1618 = vmatpush1.bf16.msra.mxu0 0
        %1619 = vmatprep.subr.bf16.mxu0 0
        %1620 = vmatpush1.bf16.msra.mxu0 0
        %1621 = vmatprep.subr.bf16.mxu0 0
        %1622 = vmatpush1.bf16.msra.mxu0 0
        %1623 = vmatprep.subr.bf16.mxu0 0
        %1624 = vmatpush1.bf16.msra.mxu0 0
        %1625 = vmatprep.subr.bf16.mxu0 0
        %1626 = vmatpush1.bf16.msra.mxu0 0
        %1627 = vmatprep.subr.bf16.mxu0 0
        %1628 = vmatpush1.bf16.msra.mxu0 0
        %1629 = vmatprep.subr.bf16.mxu0 0
        %1630 = vmatpush1.bf16.msra.mxu0 0
        %1631 = vmatprep.subr.bf16.mxu0 0
        %1632 = vmatpush1.bf16.msra.mxu0 0
        %1633 = vmatprep.mubr.bf16.mxu0 0
        %1634 = vmatmul.mubr.bf16.gmra.mrb[0].mxu0 %v1599
        %v1635 = vpop.f32.mrb[0].mxu0
        %v1636 = vadd.f32 0.0, %v1635
        %v1637 = vpop.f32.mrb[0].mxu0
        %v1638 = vpop.f32.mrb[0].mxu0
        %v1639 = vadd.f32 0.0, %v1638
        %v1640 = vpop.f32.mrb[0].mxu0
        %1641 = vdwg.mxu0
        %v1642 = vmul.f32 %v778, %v1636
        %v1643 = vmul.f32 %v783, %v1639
        %1644 = vrot.lane.b32.xlu0 %v908, 32
        %v1645 = vpop.permute.xlu0 %1644
        %1646 = vrot.lane.b32.xlu0 %v912, 32
        %v1647 = vpop.permute.xlu0 %1646
        %v1650 = vmul.f32 %v1642, %v1645
        %v1651 = vmul.f32 %v1643, %v1647
        %1652 = vset.pattern.permute.xlu0 7
        %1653 = vperm.xlu0 %1652, %v954
        %v1654 = vpop.permute.xlu0 %1653
        %1656 = vset.pattern.permute.xlu0 7
        %1657 = vperm.xlu0 %1656, %v955
        %v1658 = vpop.permute.xlu0 %1657
        %v1660 = vmul.f32 %v1650, %v1654
        %v1661 = vmul.f32 %v1651, %v1658
        %v1662 = vadd.f32 %v1571, %v1660
        %v1663 = vadd.f32 %v1572, %v1661
        %1666 = vrot.lane.b32.xlu0 %v1660, 96
        %v1667 = vpop.permute.xlu0 %1666
        %1668 = vrot.lane.b32.xlu0 %v1661, 96
        %v1669 = vpop.permute.xlu0 %1668
        %v1672 = vadd.f32 %v963, %v1667
        %v1673 = vadd.f32 %v965, %v1669
        %1674 = vst.msk [vmem:[%s537 + $0x8] sm:$0xff] %vm1321, %v1672
        %1675 = vst.msk [vmem:[%s537 + $0x18] sm:$0xff] %vm1321, %v1673
        %v1676 = vadd.f32 %v1662, 8.0
        %v1677 = vadd.f32 %v1663, 8.0
        %1678 = vst.msk [vmem:[%s530] sm:$0xff] %vm580, %v1676
        %1679 = vst.msk [vmem:[%s530 + $0x8] sm:$0xff] %vm580, %v1677
        %s1680 = sand.u32 %s298, 1
        %s1681 = scalar_lea.sflag [#allocation4], %s1680
        %s1682 = sand.u32 %s298, 1
        %s1683 = smul.addr %s1682, 16
        %s1684 = scalar_lea.vmem [#allocation8], %s1683
        %s1685 = sand.u32 %s324, 1
        %s1686 = scalar_lea.sflag [#allocation10], %s1685
        %s1687 = sand.u32 %s324, 1
        %s1688 = smul.addr %s1687, 32
        %s1689 = scalar_lea.vmem [#allocation9], %s1688
        // Predicated region
        $region77: #{tpu_custom_call.1} parent=63 // pred_check
          %p1690 = pneg %p308
        $region78: #{tpu_custom_call.1} parent=63 // pred_check_branch
          %1692 = sbr.rel (%p1690) target = $region80
        $region79: #{tpu_custom_call.1} parent=63 // pred_region
          %s1693 = smul.u32 2, %s34
          %s1695 = ssub.s32 256, 256
          %1696 = vsyncadd %s1681, %s1695
          %s1697 = smul.addr %s1693, 128
          %s1698 = scalar_lea.hbm %s11, %s1697
          %s1699 = sshll.u32 %s1684, 4
          %s1700 = int_to_ptr.vmem [resolvable:$true] %s1699
          %1705 = dma.vmem_to_hbm [thread:$0]  %s1700, 256, %s1698, %s1681, 128, 128, 8
        $region80: #{tpu_custom_call.1} parent=63 // pred_fallthru
          _
        // Predicated region
        $region81: #{tpu_custom_call.1} parent=63 // pred_check
          %p1706 = pneg %p334
        $region82: #{tpu_custom_call.1} parent=63 // pred_check_branch
          %1708 = sbr.rel (%p1706) target = $region84
        $region83: #{tpu_custom_call.1} parent=63 // pred_region
          %s1709 = smul.u32 2, %s34
          %s1711 = ssub.s32 512, 512
          %1712 = vsyncadd %s1686, %s1711
          %s1713 = smul.addr %s1709, 2
          %s1714 = smul.addr %s1713, 128
          %s1715 = scalar_lea.hbm %s12, %s1714
          %s1716 = sshll.u32 %s1689, 4
          %s1717 = int_to_ptr.vmem [resolvable:$true] %s1716
          %1722 = dma.vmem_to_hbm [thread:$0]  %s1717, 512, %s1715, %s1686, 256, 256, 16
        $region84: #{tpu_custom_call.1} parent=63 // pred_fallthru
          _
      $region64: #{tpu_custom_call.1} parent=5 // pred_fallthru
        _
      %p1723 = scmp.le.s32.totalorder 2, %s29
      // Predicated region
      $region85: #{tpu_custom_call.1} parent=5 // pred_check
        %p1724 = pneg %p1723
      $region86: #{tpu_custom_call.1} parent=5 // pred_check_branch
        %1726 = sbr.rel (%p1724) target = $region88
      $region87: #{tpu_custom_call.1} parent=5 // pred_region
        %s1727 = ssub.s32 %s29, 2
        // Predicated region
        $region89: #{tpu_custom_call.1} parent=87 // pred_check
          %p1728 = pneg %p314
        $region90: #{tpu_custom_call.1} parent=87 // pred_check_branch
          %1730 = sbr.rel (%p1728) target = $region92
        $region91: #{tpu_custom_call.1} parent=87 // pred_region
          %s1731 = sand.u32 %s299, 1
          %s1732 = scalar_lea.sflag [#allocation4], %s1731
          %s1733 = sand.u32 %s299, 1
          %s1734 = smul.addr %s1733, 16
          %s1735 = scalar_lea.vmem [#allocation8], %s1734
          %1736 = dma.done %s1732, 256
        $region92: #{tpu_custom_call.1} parent=87 // pred_fallthru
          _
        // Predicated region
        $region93: #{tpu_custom_call.1} parent=87 // pred_check
          %p1737 = pneg %p340
        $region94: #{tpu_custom_call.1} parent=87 // pred_check_branch
          %1739 = sbr.rel (%p1737) target = $region96
        $region95: #{tpu_custom_call.1} parent=87 // pred_region
          %s1740 = sand.u32 %s325, 1
          %s1741 = scalar_lea.sflag [#allocation10], %s1740
          %s1742 = sand.u32 %s325, 1
          %s1743 = smul.addr %s1742, 32
          %s1744 = scalar_lea.vmem [#allocation9], %s1743
          %1745 = dma.done %s1741, 512
        $region96: #{tpu_custom_call.1} parent=87 // pred_fallthru
          _
      $region88: #{tpu_custom_call.1} parent=5 // pred_fallthru
        _
    $region6: #{tpu_custom_call.1} parent=1 // loop_footer
      %s33 = sadd.s32 1, %s29
    $region7: #{tpu_custom_call.1} parent=1 // loop_footer_branch
      %28 = sbr.rel target = $region3
    $region8: #{tpu_custom_call.1} parent=1 // loop_exit
      _
    %1746 = vsyncpa [#allocation3], 1
    %s1747 = scalar_lea.sflag [#allocation3], 1
    %1748 = vsyncpa %s1747, 1
    %1749 = vsyncpa [#allocation6], 1
    %1750 = vsyncpa [#allocation4], 1
    %s1751 = scalar_lea.sflag [#allocation4], 1
    %1752 = vsyncpa %s1751, 1
    %1753 = vsyncpa [#allocation10], 1
    %s1754 = scalar_lea.sflag [#allocation10], 1
    %1755 = vsyncpa %s1754, 1

</llo_original>
